<compile_context>
chip_gen: v7x
topology: tpu7x:2x2x1
jax: 0.10.0
libtpu: 0.0.40
codegen_flags: <defaults>
</compile_context>

<pallas_src>
import functools
import math

import jax
import jax.numpy as jnp
from jax.experimental import pallas as pl
from jax.experimental.pallas import tpu as pltpu


def _cdiv(a, b):
    return -(-a // b)


def _ceil_to(x, m):
    return _cdiv(x, m) * m


_VMEM_CAP = None


def _vmem_cap_bytes():
    """Physical-VMEM-aware cap for vmem_limit_bytes (v5e/v6e 128MiB, v7x 64MiB)."""
    global _VMEM_CAP
    if _VMEM_CAP is None:
        try:
            phys = int(pltpu.get_tpu_info().vmem_capacity_bytes)
        except Exception:
            phys = 64 << 20                      # conservative (v7x)
        _VMEM_CAP = int(min(phys * 7 // 8, 100 << 20))
    return _VMEM_CAP


def _choose_row_tiling(n, tm_max):
    """Row tiles: multiple of 8, minimal padding, >=2 tiles for v7x megacore."""
    if n < 16:
        return n, n, 1                           # single full-dim block
    n_tiles = max(2, _cdiv(n, tm_max))
    tm = _ceil_to(_cdiv(n, n_tiles), 8)
    n_tiles = _cdiv(n, tm)
    return tm, tm * n_tiles, n_tiles


def _choose_col_tiling(d, tn_max):
    """W3 column tiles: multiple of 128, minimal padding (no pad-to-tn_max)."""
    if d <= tn_max:
        return d, d, 1                           # single full-dim block
    n_tiles = _cdiv(d, tn_max)
    tn = _ceil_to(_cdiv(d, n_tiles), 128)
    n_tiles = _cdiv(d, tn)
    return tn, tn * n_tiles, n_tiles


# -----------------------------------------------------------------------------
# Fused "proj1-MLP + residual + proj2" kernel.
#   out = ( relu(x @ W1 + b1) @ W2 + b2 + x ) @ W3 + b3
# Grid: (row_tiles, col_tiles).  The proj1 result `y` is computed once per row
# tile (col == 0) into a bf16 VMEM scratch and reused for every W3 column tile.
# -----------------------------------------------------------------------------
def _mlp_resid_proj_kernel(x_ref, w1_ref, b1_ref, w2_ref, b2_ref, w3_ref, b3_ref,
                           out_ref, y_ref):
    @pl.when(pl.program_id(1) == 0)
    def _():
        x = x_ref[...]                                         # (TM, D) f32
        h = jnp.dot(x.astype(jnp.bfloat16), w1_ref[...],
                    preferred_element_type=jnp.float32) + b1_ref[...]
        h = jnp.maximum(h, 0.0)
        y = jnp.dot(h.astype(jnp.bfloat16), w2_ref[...],
                    preferred_element_type=jnp.float32) + b2_ref[...] + x
        y_ref[...] = y.astype(jnp.bfloat16)

    out_ref[...] = (jnp.dot(y_ref[...], w3_ref[...],
                            preferred_element_type=jnp.float32)
                    + b3_ref[...]).astype(out_ref.dtype)


def mlp_resid_proj(x, w1, b1, w2, b2, w3, b3, *, tm_max=1024, tn_max=1024,
                   out_dtype=jnp.float32):
    """x: (N, D_in) -> (N, D_out). Row-tiled + W3 column-tiled, bf16 MXU."""
    n, d_in = x.shape
    d_mid = w1.shape[1]
    d_out = w3.shape[1]
    x = x.astype(jnp.float32)

    vmem_cap = _vmem_cap_bytes()
    out_bytes = jnp.dtype(out_dtype).itemsize

    # ---- choose tiles; shrink until the VMEM estimate fits this generation ----
    tm_cap, tn_cap = tm_max, tn_max
    while True:
        tm, n_pad, n_row_tiles = _choose_row_tiling(n, tm_cap)
        tn, d_out_pad, n_col_tiles = _choose_col_tiling(d_out, tn_cap)
        w3_bufs = 3 if n_col_tiles > 1 else 2
        est = (2 * tm * d_in * 4                            # x (f32, double-buffered)
               + 2 * (d_in * d_mid + d_mid * d_in) * 2      # W1/W2 resident (bf16)
               + w3_bufs * (d_in * tn * 2 + tn * 4)         # W3/b3 column tiles
               + 2 * tm * tn * out_bytes                    # output tiles
               + tm * d_in * 2                              # y scratch (bf16)
               + 2 * (d_mid + d_in) * 4)                    # b1/b2
        if est <= vmem_cap or (tn_cap <= 256 and tm_cap <= 256):
            break
        if tn_cap > 256:
            tn_cap //= 2
        else:
            tm_cap //= 2

    if n_pad != n:
        x = jnp.pad(x, ((0, n_pad - n), (0, 0)))
    if d_out_pad != d_out:
        w3 = jnp.pad(w3, ((0, 0), (0, d_out_pad - d_out)))
        b3 = jnp.pad(b3, ((0, d_out_pad - d_out),))

    # Weights should already be bf16 (prepare_params); astype is a no-op then.
    w1b = w1.astype(jnp.bfloat16)
    w2b = w2.astype(jnp.bfloat16)
    w3b = w3.astype(jnp.bfloat16)
    b1f = b1.reshape(1, -1).astype(jnp.float32)
    b2f = b2.reshape(1, -1).astype(jnp.float32)
    b3f = b3.reshape(1, -1).astype(jnp.float32)

    vmem_limit = int(min(vmem_cap, max(16 << 20, est + (4 << 20))))

    stream_kwargs = {}
    if n_col_tiles > 1:
        # deepen the W3/b3 pipeline: j==0 is long (proj1) while j>0 is one matmul
        stream_kwargs["pipeline_mode"] = pl.Buffered(3)

    out = pl.pallas_call(
        _mlp_resid_proj_kernel,
        out_shape=jax.ShapeDtypeStruct((n_pad, d_out_pad), out_dtype),
        grid=(n_row_tiles, n_col_tiles),
        in_specs=[
            pl.BlockSpec((tm, d_in), lambda i, j: (i, 0)),      # activations stream
            pl.BlockSpec((d_in, d_mid), lambda i, j: (0, 0)),   # W1 resident
            pl.BlockSpec((1, d_mid), lambda i, j: (0, 0)),
            pl.BlockSpec((d_mid, d_in), lambda i, j: (0, 0)),   # W2 resident
            pl.BlockSpec((1, d_in), lambda i, j: (0, 0)),
            pl.BlockSpec((d_in, tn), lambda i, j: (0, j), **stream_kwargs),
            pl.BlockSpec((1, tn), lambda i, j: (0, j), **stream_kwargs),
        ],
        out_specs=pl.BlockSpec((tm, tn), lambda i, j: (i, j)),
        scratch_shapes=[pltpu.VMEM((tm, d_in), jnp.bfloat16)],
        compiler_params=pltpu.CompilerParams(
            dimension_semantics=("parallel", "arbitrary"),   # col axis MUST stay arbitrary
            vmem_limit_bytes=vmem_limit),
    )(x, w1b, b1f, w2b, b2f, w3b, b3f)
    return out[:n, :d_out]


# -----------------------------------------------------------------------------
# Fused cross-attention: q is precomputed (cross_attn weight + 1/hidden scale
# folded into the token projection), so this kernel only does
#   p = softmax(q @ ent^T); out = p @ ent + tok
# over a block of batch elements per grid step.  Entity axis is padded to a
# multiple of 128 and masked with -1e30 before the softmax.
# -----------------------------------------------------------------------------
def _cross_attn_kernel(tok_ref, q_ref, ent_ref, out_ref, *, e_valid):
    tok = tok_ref[...]                                          # (Bb, T, H) f32
    q = q_ref[...]                                              # (Bb, T, H) bf16
    ent = ent_ref[...]                                          # (Bb, Ep, H) bf16
    scores = jnp.einsum("btd,bed->bte", q, ent,
                        preferred_element_type=jnp.float32)     # (Bb, T, Ep)
    e_pad = scores.shape[-1]
    if e_valid < e_pad:                                         # mask padded entities
        e_idx = jax.lax.broadcasted_iota(jnp.int32, (scores.shape[1], e_pad), 1)
        scores = jnp.where(e_idx[None, :, :] < e_valid, scores, -1e30)
    scores = scores - jnp.max(scores, axis=-1, keepdims=True)
    p = jnp.exp(scores)
    inv = pl.reciprocal(jnp.sum(p, axis=-1, keepdims=True), approx=True)
    p = (p * inv).astype(jnp.bfloat16)
    out = jnp.einsum("bte,bed->btd", p, ent, preferred_element_type=jnp.float32)
    out_ref[...] = out + tok


def cross_attn_fuse(tok, q, ent, *, rows_per_step=256):
    """tok/q: (B,T,H), ent: (B,E,H) -> (B,T,H) f32."""
    b, t, h = tok.shape
    e = ent.shape[1]

    e_pad = _ceil_to(max(e, 1), 128)                 # lane-dense entity axis
    if e_pad != e:
        ent = jnp.pad(ent, ((0, 0), (0, e_pad - e), (0, 0)))

    bb = max(1, min(b, rows_per_step // max(t, 1)))
    if b >= 2:
        bb = min(bb, _cdiv(b, 2))                    # >=2 grid steps (v7x megacore)
    b_pad = _ceil_to(b, bb)

    tok = tok.astype(jnp.float32)                    # residual stays f32
    q = q.astype(jnp.bfloat16)                       # halve DMA for q / ent
    ent = ent.astype(jnp.bfloat16)
    if b_pad != b:
        pad = ((0, b_pad - b), (0, 0), (0, 0))
        tok = jnp.pad(tok, pad)
        q = jnp.pad(q, pad)
        ent = jnp.pad(ent, pad)

    ce = pl.CostEstimate(
        flops=4 * b_pad * t * e_pad * h,
        transcendentals=b_pad * t * e_pad,
        bytes_accessed=b_pad * (t * h * (4 + 2 + 4) + e_pad * h * 2))
    est = 2 * (bb * t * h * (4 + 2 + 4) + bb * e_pad * h * 2)
    vmem_limit = int(min(_vmem_cap_bytes(), max(16 << 20, 2 * est + (2 << 20))))

    out = pl.pallas_call(
        functools.partial(_cross_attn_kernel, e_valid=e),
        out_shape=jax.ShapeDtypeStruct((b_pad, t, h), jnp.float32),
        grid=(b_pad // bb,),
        in_specs=[
            pl.BlockSpec((bb, t, h), lambda i: (i, 0, 0)),
            pl.BlockSpec((bb, t, h), lambda i: (i, 0, 0)),
            pl.BlockSpec((bb, e_pad, h), lambda i: (i, 0, 0)),
        ],
        out_specs=pl.BlockSpec((bb, t, h), lambda i: (i, 0, 0)),
        compiler_params=pltpu.CompilerParams(
            dimension_semantics=("parallel",), vmem_limit_bytes=vmem_limit),
        cost_estimate=ce,
    )(tok, q, ent)
    return out[:b]


# -----------------------------------------------------------------------------
# RGCN conv (basis decomposition, per-relation mean aggregation) — JAX glue,
# vectorized over relations with one segment_sum keyed by (relation, dst).
# TODO(synk): scatter/segment aggregation has no clean Pallas equivalent; kept
#             in plain JAX (the dense matmul hot paths are in Pallas above).
def rgcn_conv(x, edge_index, edge_type, bases, comp, w_root, bias, num_relations):
    n, d_in = x.shape
    w_rel = jnp.einsum("rb,bio->rio", comp, bases)             # (R, D_in, D_out)
    src, dst = edge_index[0], edge_index[1]
    msg = x[src]                                               # (E, D_in)
    seg = edge_type.astype(jnp.int32) * n + dst                # relation-major segments
    num_seg = num_relations * n
    agg = jax.ops.segment_sum(msg, seg, num_segments=num_seg)  # (R*N, D_in)
    cnt = jax.ops.segment_sum(jnp.ones(seg.shape, jnp.float32), seg,
                              num_segments=num_seg)
    agg = agg / jnp.maximum(cnt, 1.0)[:, None]                 # per-relation mean
    agg = agg.reshape(num_relations, n, d_in)
    out = jnp.einsum("rni,rio->no", agg, w_rel)
    out = out + x @ w_root + bias
    return out


# -----------------------------------------------------------------------------
# Parameter construction (deterministic synthetic weights)
# -----------------------------------------------------------------------------
def init_params(key, cfg):
    h = cfg["hidden_size"]
    th = cfg["token_hidden_size"]
    eh = h // 2                                  # entity_hidden_size
    n_entity = cfg["n_entity"]
    keys = jax.random.split(key, 24)
    k = iter(keys)

    def lin(kk, d_in, d_out):
        w = jax.random.normal(kk, (d_in, d_out), jnp.float32) * 0.05
        b = jnp.zeros((d_out,), jnp.float32)
        return w, b

    stdv = math.sqrt(6.0 / (n_entity + eh))
    params = {}
    params["node_embeds"] = jax.random.uniform(next(k), (n_entity, eh),
                                               jnp.float32, -stdv, stdv)
    params["rgcn_bases"] = jax.random.normal(next(k), (cfg["num_bases"], eh, eh),
                                             jnp.float32) * 0.05
    params["rgcn_comp"] = jax.random.normal(next(k), (cfg["num_relations"],
                                                      cfg["num_bases"]),
                                            jnp.float32) * 0.05
    params["rgcn_root"] = jax.random.normal(next(k), (eh, eh), jnp.float32) * 0.05
    params["rgcn_bias"] = jnp.zeros((eh,), jnp.float32)
    params["ep1_w1"], params["ep1_b1"] = lin(next(k), eh, eh // 2)
    params["ep1_w2"], params["ep1_b2"] = lin(next(k), eh // 2, eh)
    params["ep2_w"], params["ep2_b"] = lin(next(k), eh, h)
    params["tp1_w1"], params["tp1_b1"] = lin(next(k), th, th // 2)
    params["tp1_w2"], params["tp1_b2"] = lin(next(k), th // 2, th)
    params["tp2_w"], params["tp2_b"] = lin(next(k), th, h)
    params["cross_w"] = jax.random.normal(next(k), (h, h), jnp.float32) * 0.05
    params["pp1_w1"], params["pp1_b1"] = lin(next(k), h, h // 2)
    params["pp1_w2"], params["pp1_b2"] = lin(next(k), h // 2, h)
    params["pp2_w"], params["pp2_b"] = lin(next(k), h,
                                           cfg["n_layer"] * cfg["n_block"] * h)
    return params


def prepare_params(params, cfg):
    """One-time (outside jit) bf16 weight casts + fused token/cross W3 build."""
    h = cfg["hidden_size"]
    p = dict(params)
    # fold cross_attn weight + 1/hidden score scale into extra W3 columns
    w3q = jnp.concatenate(
        [params["tp2_w"], (params["tp2_w"] @ params["cross_w"]) / float(h)], axis=1)
    b3q = jnp.concatenate(
        [params["tp2_b"], (params["tp2_b"] @ params["cross_w"]) / float(h)], axis=0)
    p["tp_w3q_bf16"] = w3q.astype(jnp.bfloat16)
    p["tp_b3q"] = b3q
    for name in ["ep1_w1", "ep1_w2", "ep2_w",
                 "tp1_w1", "tp1_w2",
                 "pp1_w1", "pp1_w2", "pp2_w"]:
        p[name + "_bf16"] = params[name].astype(jnp.bfloat16)
    return p


# -----------------------------------------------------------------------------
# Forward (default branch of KGPrompt.forward)
# -----------------------------------------------------------------------------
def kgprompt_forward(params, entity_ids, token_embeds, edge_index, edge_type, cfg):
    h = cfg["hidden_size"]
    n_head = cfg["n_head"]
    head_dim = h // n_head
    n_layer = cfg["n_layer"]

    # ---- get_entity_embeds: RGCN over all nodes (JAX glue); gather FIRST,
    #      then run entity_proj1(+residual)/entity_proj2 on B*e_len rows only.
    x = params["node_embeds"]
    kg_out = rgcn_conv(x, edge_index, edge_type, params["rgcn_bases"],
                       params["rgcn_comp"], params["rgcn_root"],
                       params["rgcn_bias"], cfg["num_relations"])
    ent_base = kg_out + x                                     # (n_entity, eh)

    b, e_len = entity_ids.shape
    gathered = jnp.take(ent_base, entity_ids.reshape(-1), axis=0)   # (B*e_len, eh)
    entity_embeds = mlp_resid_proj(gathered,
                                   params["ep1_w1_bf16"], params["ep1_b1"],
                                   params["ep1_w2_bf16"], params["ep1_b2"],
                                   params["ep2_w_bf16"], params["ep2_b"])
    entity_embeds = entity_embeds.reshape(b, e_len, h)
    # TODO(synk): shape!=None branch (GCNModelSIGVAE + adjacency build) not
    #             translated (external module, data-dependent graph construction).

    # ---- token projections: fused W3 = [tp2_w | tp2_w@cross_w/H] pre-built in
    #      prepare_params -> tok and pre-scaled q from ONE fused kernel call.
    bt, t_len, th = token_embeds.shape
    tokq = mlp_resid_proj(token_embeds.reshape(bt * t_len, th),
                          params["tp1_w1_bf16"], params["tp1_b1"],
                          params["tp1_w2_bf16"], params["tp1_b2"],
                          params["tp_w3q_bf16"], params["tp_b3q"])   # (B*T, 2H)
    tok = tokq[:, :h].reshape(bt, t_len, h)
    q = tokq[:, h:].reshape(bt, t_len, h)

    # ---- cross attention (output_entity=False path) ----
    prompt = cross_attn_fuse(tok, q, entity_embeds)            # (B, T, H)
    prompt_len = t_len
    # TODO(synk): output_entity=True and rec/conv prefix branches not exercised here.

    # ---- prompt projections (largest output -> bf16 writeback) ----
    prompt2d = mlp_resid_proj(prompt.reshape(b * prompt_len, h),
                              params["pp1_w1_bf16"], params["pp1_b1"],
                              params["pp1_w2_bf16"], params["pp1_b2"],
                              params["pp2_w_bf16"], params["pp2_b"],
                              out_dtype=jnp.bfloat16)          # (B*L, n_layer*2*H)

    prompt_embeds = prompt2d.reshape(b, prompt_len, n_layer, 2, n_head, head_dim)
    prompt_embeds = jnp.transpose(prompt_embeds, (2, 3, 0, 4, 1, 5))
    # returns (mu, logvar, z, eps, prompt_embeds); the first four are None here
    return None, None, None, None, prompt_embeds


# -----------------------------------------------------------------------------
if __name__ == "__main__":
    cfg = dict(
        hidden_size=32,
        token_hidden_size=32,
        n_head=2,
        n_layer=2,
        n_block=2,          # 2 == key/value, matches the reshape in forward()
        n_entity=64,
        num_relations=3,
        num_bases=2,
    )
    batch = 2
    entity_len = 4
    token_len = 8
    num_edges = 32

    root = jax.random.PRNGKey(0)
    k_param, k_eid, k_tok, k_esrc, k_edst, k_etype = jax.random.split(root, 6)

    params = init_params(k_param, cfg)
    params = prepare_params(params, cfg)   # one-time bf16 casts + fused W3

    entity_ids = jax.random.randint(k_eid, (batch, entity_len), 0, cfg["n_entity"],
                                    dtype=jnp.int32)
    token_embeds = jax.random.normal(k_tok, (batch, token_len,
                                             cfg["token_hidden_size"]), jnp.float32)
    edge_src = jax.random.randint(k_esrc, (num_edges,), 0, cfg["n_entity"],
                                  dtype=jnp.int32)
    edge_dst = jax.random.randint(k_edst, (num_edges,), 0, cfg["n_entity"],
                                  dtype=jnp.int32)
    edge_index = jnp.stack([edge_src, edge_dst], axis=0)           # (2, E)
    edge_type = jax.random.randint(k_etype, (num_edges,), 0, cfg["num_relations"],
                                   dtype=jnp.int32)

    fwd = jax.jit(functools.partial(kgprompt_forward, cfg=cfg))
    _, _, _, _, prompt_embeds = fwd(params, entity_ids, token_embeds,
                                    edge_index, edge_type)
    prompt_embeds = jax.block_until_ready(prompt_embeds)

    expected = (cfg["n_layer"], 2, batch, cfg["n_head"], token_len,
                cfg["hidden_size"] // cfg["n_head"])
    assert prompt_embeds.shape == expected, (prompt_embeds.shape, expected)
    assert bool(jnp.all(jnp.isfinite(prompt_embeds.astype(jnp.float32))))
    print("KERNEL_OK")
</pallas_src>

<mosaic_0001>
module attributes {stable_mosaic.version = 11 : i64} {
  func.func private @main(%arg0: i32) attributes {dimension_semantics = [#tpu.dimension_semantics<core_parallel>], iteration_bounds = array<i64: 2>, tpu.core_type = #tpu.core_type<sc_scalar_subcore>, window_params = []} {
    return
  }
}

module attributes {stable_mosaic.version = 11 : i64} {
  func.func private @main(%arg0: i32) attributes {dimension_semantics = [#tpu.dimension_semantics<core_parallel>], iteration_bounds = array<i64: 2>, tpu.core_type = #tpu.core_type<sc_scalar_subcore>, window_params = []} {
    return
  }
}

module attributes {stable_mosaic.version = 11 : i64} {
  func.func @_mlp_resid_proj_kernel(%arg0: i32, %arg1: i32, %arg2: memref<8x32xf32, #tpu.memory_space<vmem>>, %arg3: memref<32x16xbf16, #tpu.memory_space<vmem>>, %arg4: memref<1x16xf32, #tpu.memory_space<vmem>>, %arg5: memref<16x32xbf16, #tpu.memory_space<vmem>>, %arg6: memref<1x32xf32, #tpu.memory_space<vmem>>, %arg7: memref<32x64xbf16, #tpu.memory_space<vmem>>, %arg8: memref<1x64xf32, #tpu.memory_space<vmem>>, %arg9: memref<8x64xf32, #tpu.memory_space<vmem>>, %arg10: memref<8x32xbf16, #tpu.memory_space<vmem>>) attributes {dimension_semantics = [#tpu.dimension_semantics<parallel>, #tpu.dimension_semantics<arbitrary>], iteration_bounds = array<i64: 2, 1>, scalar_prefetch = 0 : i64, scratch_operands = 1 : i64, tpu.core_type = #tpu.core_type<tc>, window_params = [{transform_indices = @transform_0, window_bounds = array<i64: 8, 32>}, {pipeline_mode = #tpu.pipeline_mode<synchronous>, transform_indices = @transform_1, window_bounds = array<i64: 32, 16>}, {pipeline_mode = #tpu.pipeline_mode<synchronous>, transform_indices = @transform_2, window_bounds = array<i64: 1, 16>}, {pipeline_mode = #tpu.pipeline_mode<synchronous>, transform_indices = @transform_3, window_bounds = array<i64: 16, 32>}, {pipeline_mode = #tpu.pipeline_mode<synchronous>, transform_indices = @transform_4, window_bounds = array<i64: 1, 32>}, {transform_indices = @transform_5, window_bounds = array<i64: 32, 64>}, {transform_indices = @transform_6, window_bounds = array<i64: 1, 64>}, {transform_indices = @transform_7, window_bounds = array<i64: 8, 64>}]} {
    %c0_i32 = arith.constant 0 : i32
    %0 = arith.cmpi eq, %arg1, %c0_i32 : i32
    %1 = arith.extui %0 : i1 to i32
    %c0_i32_0 = arith.constant 0 : i32
    %2 = arith.cmpi ne, %1, %c0_i32_0 : i32
    scf.if %2 {
      %c0_8 = arith.constant 0 : index
      %c0_9 = arith.constant 0 : index
      %10 = vector.load %arg2[%c0_8, %c0_9] : memref<8x32xf32, #tpu.memory_space<vmem>>, vector<8x32xf32>
      %11 = arith.truncf %10 : vector<8x32xf32> to vector<8x32xbf16>
      %c0_10 = arith.constant 0 : index
      %c0_11 = arith.constant 0 : index
      %12 = vector.load %arg3[%c0_10, %c0_11] : memref<32x16xbf16, #tpu.memory_space<vmem>>, vector<32x16xbf16>
      %cst_12 = arith.constant dense<0.000000e+00> : vector<8x16xf32>
      %13 = tpu.matmul %11, %12, %cst_12 {dimension_numbers = #tpu.dot_dimension_numbers<[1], [0], [0], [1], [0, 0, 1, 1], [], []>} : vector<8x32xbf16>, vector<32x16xbf16>, vector<8x16xf32> -> vector<8x16xf32>
      %c0_13 = arith.constant 0 : index
      %c0_14 = arith.constant 0 : index
      %14 = vector.load %arg4[%c0_13, %c0_14] : memref<1x16xf32, #tpu.memory_space<vmem>>, vector<1x16xf32>
      %15 = vector.broadcast %14 : vector<1x16xf32> to vector<8x16xf32>
      %16 = arith.addf %13, %15 : vector<8x16xf32>
      %cst_15 = arith.constant 0.000000e+00 : f32
      %17 = vector.broadcast %cst_15 : f32 to vector<8x16xf32>
      %18 = arith.maximumf %16, %17 : vector<8x16xf32>
      %19 = arith.truncf %18 : vector<8x16xf32> to vector<8x16xbf16>
      %c0_16 = arith.constant 0 : index
      %c0_17 = arith.constant 0 : index
      %20 = vector.load %arg5[%c0_16, %c0_17] : memref<16x32xbf16, #tpu.memory_space<vmem>>, vector<16x32xbf16>
      %cst_18 = arith.constant dense<0.000000e+00> : vector<8x32xf32>
      %21 = tpu.matmul %19, %20, %cst_18 {dimension_numbers = #tpu.dot_dimension_numbers<[1], [0], [0], [1], [0, 0, 1, 1], [], []>} : vector<8x16xbf16>, vector<16x32xbf16>, vector<8x32xf32> -> vector<8x32xf32>
      %c0_19 = arith.constant 0 : index
      %c0_20 = arith.constant 0 : index
      %22 = vector.load %arg6[%c0_19, %c0_20] : memref<1x32xf32, #tpu.memory_space<vmem>>, vector<1x32xf32>
      %23 = vector.broadcast %22 : vector<1x32xf32> to vector<8x32xf32>
      %24 = arith.addf %21, %23 : vector<8x32xf32>
      %25 = arith.addf %24, %10 : vector<8x32xf32>
      %26 = arith.truncf %25 : vector<8x32xf32> to vector<8x32xbf16>
      %c0_21 = arith.constant 0 : index
      %c0_22 = arith.constant 0 : index
      %27 = vector.load %arg10[%c0_21, %c0_22] : memref<8x32xbf16, #tpu.memory_space<vmem>>, vector<8x32xbf16>
      tpu.vector_store %arg10[%c0_21, %c0_22], %26 {strides = array<i32>} : memref<8x32xbf16, #tpu.memory_space<vmem>>, vector<8x32xbf16>,
    } else {
    }
    %c0 = arith.constant 0 : index
    %c0_1 = arith.constant 0 : index
    %3 = vector.load %arg10[%c0, %c0_1] : memref<8x32xbf16, #tpu.memory_space<vmem>>, vector<8x32xbf16>
    %c0_2 = arith.constant 0 : index
    %c0_3 = arith.constant 0 : index
    %4 = vector.load %arg7[%c0_2, %c0_3] : memref<32x64xbf16, #tpu.memory_space<vmem>>, vector<32x64xbf16>
    %cst = arith.constant dense<0.000000e+00> : vector<8x64xf32>
    %5 = tpu.matmul %3, %4, %cst {dimension_numbers = #tpu.dot_dimension_numbers<[1], [0], [0], [1], [0, 0, 1, 1], [], []>} : vector<8x32xbf16>, vector<32x64xbf16>, vector<8x64xf32> -> vector<8x64xf32>
    %c0_4 = arith.constant 0 : index
    %c0_5 = arith.constant 0 : index
    %6 = vector.load %arg8[%c0_4, %c0_5] : memref<1x64xf32, #tpu.memory_space<vmem>>, vector<1x64xf32>
    %7 = vector.broadcast %6 : vector<1x64xf32> to vector<8x64xf32>
    %8 = arith.addf %5, %7 : vector<8x64xf32>
    %c0_6 = arith.constant 0 : index
    %c0_7 = arith.constant 0 : index
    %9 = vector.load %arg9[%c0_6, %c0_7] : memref<8x64xf32, #tpu.memory_space<vmem>>, vector<8x64xf32>
    tpu.vector_store %arg9[%c0_6, %c0_7], %8 {strides = array<i32>} : memref<8x64xf32, #tpu.memory_space<vmem>>, vector<8x64xf32>,
    return
  }
  func.func @transform_0(%arg0: i32, %arg1: i32) -> (i32, i32) {
    %c0_i32 = arith.constant 0 : i32
    %c0_i32_0 = arith.constant 0 : i32
    return %arg0, %c0_i32 : i32, i32
  }
  func.func @transform_1(%arg0: i32, %arg1: i32) -> (i32, i32) {
    %c0_i32 = arith.constant 0 : i32
    %c0_i32_0 = arith.constant 0 : i32
    %c0_i32_1 = arith.constant 0 : i32
    return %c0_i32, %c0_i32_0 : i32, i32
  }
  func.func @transform_2(%arg0: i32, %arg1: i32) -> (i32, i32) {
    %c0_i32 = arith.constant 0 : i32
    %c0_i32_0 = arith.constant 0 : i32
    %c0_i32_1 = arith.constant 0 : i32
    return %c0_i32, %c0_i32_0 : i32, i32
  }
  func.func @transform_3(%arg0: i32, %arg1: i32) -> (i32, i32) {
    %c0_i32 = arith.constant 0 : i32
    %c0_i32_0 = arith.constant 0 : i32
    %c0_i32_1 = arith.constant 0 : i32
    return %c0_i32, %c0_i32_0 : i32, i32
  }
  func.func @transform_4(%arg0: i32, %arg1: i32) -> (i32, i32) {
    %c0_i32 = arith.constant 0 : i32
    %c0_i32_0 = arith.constant 0 : i32
    %c0_i32_1 = arith.constant 0 : i32
    return %c0_i32, %c0_i32_0 : i32, i32
  }
  func.func @transform_5(%arg0: i32, %arg1: i32) -> (i32, i32) {
    %c0_i32 = arith.constant 0 : i32
    %c0_i32_0 = arith.constant 0 : i32
    return %c0_i32, %arg1 : i32, i32
  }
  func.func @transform_6(%arg0: i32, %arg1: i32) -> (i32, i32) {
    %c0_i32 = arith.constant 0 : i32
    %c0_i32_0 = arith.constant 0 : i32
    return %c0_i32, %arg1 : i32, i32
  }
  func.func @transform_7(%arg0: i32, %arg1: i32) -> (i32, i32) {
    %c0_i32 = arith.constant 0 : i32
    return %arg0, %arg1 : i32, i32
  }
}

module attributes {stable_mosaic.version = 11 : i64} {
  func.func @_mlp_resid_proj_kernel(%arg0: i32, %arg1: i32, %arg2: memref<8x32xf32, #tpu.memory_space<vmem>>, %arg3: memref<32x16xbf16, #tpu.memory_space<vmem>>, %arg4: memref<1x16xf32, #tpu.memory_space<vmem>>, %arg5: memref<16x32xbf16, #tpu.memory_space<vmem>>, %arg6: memref<1x32xf32, #tpu.memory_space<vmem>>, %arg7: memref<32x128xbf16, #tpu.memory_space<vmem>>, %arg8: memref<1x128xf32, #tpu.memory_space<vmem>>, %arg9: memref<8x128xbf16, #tpu.memory_space<vmem>>, %arg10: memref<8x32xbf16, #tpu.memory_space<vmem>>) attributes {dimension_semantics = [#tpu.dimension_semantics<parallel>, #tpu.dimension_semantics<arbitrary>], iteration_bounds = array<i64: 2, 1>, scalar_prefetch = 0 : i64, scratch_operands = 1 : i64, tpu.core_type = #tpu.core_type<tc>, window_params = [{transform_indices = @transform_0, window_bounds = array<i64: 8, 32>}, {pipeline_mode = #tpu.pipeline_mode<synchronous>, transform_indices = @transform_1, window_bounds = array<i64: 32, 16>}, {pipeline_mode = #tpu.pipeline_mode<synchronous>, transform_indices = @transform_2, window_bounds = array<i64: 1, 16>}, {pipeline_mode = #tpu.pipeline_mode<synchronous>, transform_indices = @transform_3, window_bounds = array<i64: 16, 32>}, {pipeline_mode = #tpu.pipeline_mode<synchronous>, transform_indices = @transform_4, window_bounds = array<i64: 1, 32>}, {transform_indices = @transform_5, window_bounds = array<i64: 32, 128>}, {transform_indices = @transform_6, window_bounds = array<i64: 1, 128>}, {transform_indices = @transform_7, window_bounds = array<i64: 8, 128>}]} {
    %c0_i32 = arith.constant 0 : i32
    %0 = arith.cmpi eq, %arg1, %c0_i32 : i32
    %1 = arith.extui %0 : i1 to i32
    %c0_i32_0 = arith.constant 0 : i32
    %2 = arith.cmpi ne, %1, %c0_i32_0 : i32
    scf.if %2 {
      %c0_8 = arith.constant 0 : index
      %c0_9 = arith.constant 0 : index
      %11 = vector.load %arg2[%c0_8, %c0_9] : memref<8x32xf32, #tpu.memory_space<vmem>>, vector<8x32xf32>
      %12 = arith.truncf %11 : vector<8x32xf32> to vector<8x32xbf16>
      %c0_10 = arith.constant 0 : index
      %c0_11 = arith.constant 0 : index
      %13 = vector.load %arg3[%c0_10, %c0_11] : memref<32x16xbf16, #tpu.memory_space<vmem>>, vector<32x16xbf16>
      %cst_12 = arith.constant dense<0.000000e+00> : vector<8x16xf32>
      %14 = tpu.matmul %12, %13, %cst_12 {dimension_numbers = #tpu.dot_dimension_numbers<[1], [0], [0], [1], [0, 0, 1, 1], [], []>} : vector<8x32xbf16>, vector<32x16xbf16>, vector<8x16xf32> -> vector<8x16xf32>
      %c0_13 = arith.constant 0 : index
      %c0_14 = arith.constant 0 : index
      %15 = vector.load %arg4[%c0_13, %c0_14] : memref<1x16xf32, #tpu.memory_space<vmem>>, vector<1x16xf32>
      %16 = vector.broadcast %15 : vector<1x16xf32> to vector<8x16xf32>
      %17 = arith.addf %14, %16 : vector<8x16xf32>
      %cst_15 = arith.constant 0.000000e+00 : f32
      %18 = vector.broadcast %cst_15 : f32 to vector<8x16xf32>
      %19 = arith.maximumf %17, %18 : vector<8x16xf32>
      %20 = arith.truncf %19 : vector<8x16xf32> to vector<8x16xbf16>
      %c0_16 = arith.constant 0 : index
      %c0_17 = arith.constant 0 : index
      %21 = vector.load %arg5[%c0_16, %c0_17] : memref<16x32xbf16, #tpu.memory_space<vmem>>, vector<16x32xbf16>
      %cst_18 = arith.constant dense<0.000000e+00> : vector<8x32xf32>
      %22 = tpu.matmul %20, %21, %cst_18 {dimension_numbers = #tpu.dot_dimension_numbers<[1], [0], [0], [1], [0, 0, 1, 1], [], []>} : vector<8x16xbf16>, vector<16x32xbf16>, vector<8x32xf32> -> vector<8x32xf32>
      %c0_19 = arith.constant 0 : index
      %c0_20 = arith.constant 0 : index
      %23 = vector.load %arg6[%c0_19, %c0_20] : memref<1x32xf32, #tpu.memory_space<vmem>>, vector<1x32xf32>
      %24 = vector.broadcast %23 : vector<1x32xf32> to vector<8x32xf32>
      %25 = arith.addf %22, %24 : vector<8x32xf32>
      %26 = arith.addf %25, %11 : vector<8x32xf32>
      %27 = arith.truncf %26 : vector<8x32xf32> to vector<8x32xbf16>
      %c0_21 = arith.constant 0 : index
      %c0_22 = arith.constant 0 : index
      %28 = vector.load %arg10[%c0_21, %c0_22] : memref<8x32xbf16, #tpu.memory_space<vmem>>, vector<8x32xbf16>
      tpu.vector_store %arg10[%c0_21, %c0_22], %27 {strides = array<i32>} : memref<8x32xbf16, #tpu.memory_space<vmem>>, vector<8x32xbf16>,
    } else {
    }
    %c0 = arith.constant 0 : index
    %c0_1 = arith.constant 0 : index
    %3 = vector.load %arg10[%c0, %c0_1] : memref<8x32xbf16, #tpu.memory_space<vmem>>, vector<8x32xbf16>
    %c0_2 = arith.constant 0 : index
    %c0_3 = arith.constant 0 : index
    %4 = vector.load %arg7[%c0_2, %c0_3] : memref<32x128xbf16, #tpu.memory_space<vmem>>, vector<32x128xbf16>
    %cst = arith.constant dense<0.000000e+00> : vector<8x128xf32>
    %5 = tpu.matmul %3, %4, %cst {dimension_numbers = #tpu.dot_dimension_numbers<[1], [0], [0], [1], [0, 0, 1, 1], [], []>} : vector<8x32xbf16>, vector<32x128xbf16>, vector<8x128xf32> -> vector<8x128xf32>
    %c0_4 = arith.constant 0 : index
    %c0_5 = arith.constant 0 : index
    %6 = vector.load %arg8[%c0_4, %c0_5] : memref<1x128xf32, #tpu.memory_space<vmem>>, vector<1x128xf32>
    %7 = vector.broadcast %6 : vector<1x128xf32> to vector<8x128xf32>
    %8 = arith.addf %5, %7 : vector<8x128xf32>
    %9 = arith.truncf %8 : vector<8x128xf32> to vector<8x128xbf16>
    %c0_6 = arith.constant 0 : index
    %c0_7 = arith.constant 0 : index
    %10 = vector.load %arg9[%c0_6, %c0_7] : memref<8x128xbf16, #tpu.memory_space<vmem>>, vector<8x128xbf16>
    tpu.vector_store %arg9[%c0_6, %c0_7], %9 {strides = array<i32>} : memref<8x128xbf16, #tpu.memory_space<vmem>>, vector<8x128xbf16>,
    return
  }
  func.func @transform_0(%arg0: i32, %arg1: i32) -> (i32, i32) {
    %c0_i32 = arith.constant 0 : i32
    %c0_i32_0 = arith.constant 0 : i32
    return %arg0, %c0_i32 : i32, i32
  }
  func.func @transform_1(%arg0: i32, %arg1: i32) -> (i32, i32) {
    %c0_i32 = arith.constant 0 : i32
    %c0_i32_0 = arith.constant 0 : i32
    %c0_i32_1 = arith.constant 0 : i32
    return %c0_i32, %c0_i32_0 : i32, i32
  }
  func.func @transform_2(%arg0: i32, %arg1: i32) -> (i32, i32) {
    %c0_i32 = arith.constant 0 : i32
    %c0_i32_0 = arith.constant 0 : i32
    %c0_i32_1 = arith.constant 0 : i32
    return %c0_i32, %c0_i32_0 : i32, i32
  }
  func.func @transform_3(%arg0: i32, %arg1: i32) -> (i32, i32) {
    %c0_i32 = arith.constant 0 : i32
    %c0_i32_0 = arith.constant 0 : i32
    %c0_i32_1 = arith.constant 0 : i32
    return %c0_i32, %c0_i32_0 : i32, i32
  }
  func.func @transform_4(%arg0: i32, %arg1: i32) -> (i32, i32) {
    %c0_i32 = arith.constant 0 : i32
    %c0_i32_0 = arith.constant 0 : i32
    %c0_i32_1 = arith.constant 0 : i32
    return %c0_i32, %c0_i32_0 : i32, i32
  }
  func.func @transform_5(%arg0: i32, %arg1: i32) -> (i32, i32) {
    %c0_i32 = arith.constant 0 : i32
    %c0_i32_0 = arith.constant 0 : i32
    return %c0_i32, %arg1 : i32, i32
  }
  func.func @transform_6(%arg0: i32, %arg1: i32) -> (i32, i32) {
    %c0_i32 = arith.constant 0 : i32
    %c0_i32_0 = arith.constant 0 : i32
    return %c0_i32, %arg1 : i32, i32
  }
  func.func @transform_7(%arg0: i32, %arg1: i32) -> (i32, i32) {
    %c0_i32 = arith.constant 0 : i32
    return %arg0, %arg1 : i32, i32
  }
}

module attributes {stable_mosaic.version = 11 : i64} {
  func.func @_cross_attn_kernel(%arg0: i32, %arg1: memref<1x8x32xf32, #tpu.memory_space<vmem>>, %arg2: memref<1x8x32xbf16, #tpu.memory_space<vmem>>, %arg3: memref<1x128x32xbf16, #tpu.memory_space<vmem>>, %arg4: memref<1x8x32xf32, #tpu.memory_space<vmem>>) attributes {dimension_semantics = [#tpu.dimension_semantics<parallel>], iteration_bounds = array<i64: 2>, scalar_prefetch = 0 : i64, scratch_operands = 0 : i64, tpu.core_type = #tpu.core_type<tc>, window_params = [{transform_indices = @transform_0, window_bounds = array<i64: 1, 8, 32>}, {transform_indices = @transform_1, window_bounds = array<i64: 1, 8, 32>}, {transform_indices = @transform_2, window_bounds = array<i64: 1, 128, 32>}, {transform_indices = @transform_3, window_bounds = array<i64: 1, 8, 32>}]} {
    %c0 = arith.constant 0 : index
    %c0_0 = arith.constant 0 : index
    %c0_1 = arith.constant 0 : index
    %0 = vector.load %arg1[%c0, %c0_0, %c0_1] : memref<1x8x32xf32, #tpu.memory_space<vmem>>, vector<1x8x32xf32>
    %c0_2 = arith.constant 0 : index
    %c0_3 = arith.constant 0 : index
    %c0_4 = arith.constant 0 : index
    %1 = vector.load %arg2[%c0_2, %c0_3, %c0_4] : memref<1x8x32xbf16, #tpu.memory_space<vmem>>, vector<1x8x32xbf16>
    %c0_5 = arith.constant 0 : index
    %c0_6 = arith.constant 0 : index
    %c0_7 = arith.constant 0 : index
    %2 = vector.load %arg3[%c0_5, %c0_6, %c0_7] : memref<1x128x32xbf16, #tpu.memory_space<vmem>>, vector<1x128x32xbf16>
    "tpu.trace_start"() <{level = 10 : i32, message = "btd,bed->bte"}> : () -> ()
    %cst = arith.constant dense<0.000000e+00> : vector<1x8x128xf32>
    %3 = tpu.matmul %1, %2, %cst {dimension_numbers = #tpu.dot_dimension_numbers<[2], [2], [1], [1], [0, 0, 0, 1, 1, 1], [0], [0]>} : vector<1x8x32xbf16>, vector<1x128x32xbf16>, vector<1x8x128xf32> -> vector<1x8x128xf32>
    "tpu.trace_stop"() : () -> ()
    %4 = tpu.iota {dimensions = array<i32: 1>} : vector<8x128xi32>
    %5 = vector.shape_cast %4 : vector<8x128xi32> to vector<1x8x128xi32>
    %c4_i32 = arith.constant 4 : i32
    %6 = vector.broadcast %c4_i32 : i32 to vector<1x8x128xi32>
    %7 = arith.cmpi slt, %5, %6 : vector<1x8x128xi32>
    %cst_8 = arith.constant -1.000000e+30 : f32
    %8 = vector.broadcast %cst_8 : f32 to vector<1x8x128xf32>
    %9 = arith.select %7, %3, %8 : vector<1x8x128xi1>, vector<1x8x128xf32>
    %cst_9 = arith.constant dense<0xFF800000> : vector<1x8xf32>
    %10 = vector.multi_reduction <maximumf>, %9, %cst_9 [2] : vector<1x8x128xf32> to vector<1x8xf32>
    %11 = vector.shape_cast %10 : vector<1x8xf32> to vector<1x8x1xf32>
    %12 = vector.broadcast %11 : vector<1x8x1xf32> to vector<1x8x128xf32>
    %13 = arith.subf %9, %12 : vector<1x8x128xf32>
    %14 = math.exp %13 : vector<1x8x128xf32>
    %cst_10 = arith.constant dense<0.000000e+00> : vector<1x8xf32>
    %15 = vector.multi_reduction <add>, %14, %cst_10 [2] : vector<1x8x128xf32> to vector<1x8xf32>
    %16 = vector.shape_cast %15 : vector<1x8xf32> to vector<1x8x1xf32>
    %17 = tpu.reciprocal %16 {approx = true} : vector<1x8x1xf32> -> vector<1x8x1xf32>
    %18 = vector.broadcast %17 : vector<1x8x1xf32> to vector<1x8x128xf32>
    %19 = arith.mulf %14, %18 : vector<1x8x128xf32>
    %20 = arith.truncf %19 : vector<1x8x128xf32> to vector<1x8x128xbf16>
    "tpu.trace_start"() <{level = 10 : i32, message = "bte,bed->btd"}> : () -> ()
    %cst_11 = arith.constant dense<0.000000e+00> : vector<1x8x32xf32>
    %21 = tpu.matmul %20, %2, %cst_11 {dimension_numbers = #tpu.dot_dimension_numbers<[2], [1], [1], [2], [0, 0, 0, 1, 1, 2], [0], [0]>} : vector<1x8x128xbf16>, vector<1x128x32xbf16>, vector<1x8x32xf32> -> vector<1x8x32xf32>
    "tpu.trace_stop"() : () -> ()
    %22 = arith.addf %21, %0 : vector<1x8x32xf32>
    %c0_12 = arith.constant 0 : index
    %c0_13 = arith.constant 0 : index
    %c0_14 = arith.constant 0 : index
    %23 = vector.load %arg4[%c0_12, %c0_13, %c0_14] : memref<1x8x32xf32, #tpu.memory_space<vmem>>, vector<1x8x32xf32>
    tpu.vector_store %arg4[%c0_12, %c0_13, %c0_14], %22 {strides = array<i32>} : memref<1x8x32xf32, #tpu.memory_space<vmem>>, vector<1x8x32xf32>,
    return
  }
  func.func @transform_0(%arg0: i32) -> (i32, i32, i32) {
    %c0_i32 = arith.constant 0 : i32
    %c0_i32_0 = arith.constant 0 : i32
    %c0_i32_1 = arith.constant 0 : i32
    return %arg0, %c0_i32, %c0_i32_0 : i32, i32, i32
  }
  func.func @transform_1(%arg0: i32) -> (i32, i32, i32) {
    %c0_i32 = arith.constant 0 : i32
    %c0_i32_0 = arith.constant 0 : i32
    %c0_i32_1 = arith.constant 0 : i32
    return %arg0, %c0_i32, %c0_i32_0 : i32, i32, i32
  }
  func.func @transform_2(%arg0: i32) -> (i32, i32, i32) {
    %c0_i32 = arith.constant 0 : i32
    %c0_i32_0 = arith.constant 0 : i32
    %c0_i32_1 = arith.constant 0 : i32
    return %arg0, %c0_i32, %c0_i32_0 : i32, i32, i32
  }
  func.func @transform_3(%arg0: i32) -> (i32, i32, i32) {
    %c0_i32 = arith.constant 0 : i32
    %c0_i32_0 = arith.constant 0 : i32
    %c0_i32_1 = arith.constant 0 : i32
    return %arg0, %c0_i32, %c0_i32_0 : i32, i32, i32
  }
}

module attributes {stable_mosaic.version = 11 : i64} {
  func.func @_mlp_resid_proj_kernel(%arg0: i32, %arg1: i32, %arg2: memref<8x16xf32, #tpu.memory_space<vmem>>, %arg3: memref<16x8xbf16, #tpu.memory_space<vmem>>, %arg4: memref<1x8xf32, #tpu.memory_space<vmem>>, %arg5: memref<8x16xbf16, #tpu.memory_space<vmem>>, %arg6: memref<1x16xf32, #tpu.memory_space<vmem>>, %arg7: memref<16x32xbf16, #tpu.memory_space<vmem>>, %arg8: memref<1x32xf32, #tpu.memory_space<vmem>>, %arg9: memref<8x32xf32, #tpu.memory_space<vmem>>, %arg10: memref<8x16xbf16, #tpu.memory_space<vmem>>) attributes {dimension_semantics = [#tpu.dimension_semantics<parallel>, #tpu.dimension_semantics<arbitrary>], iteration_bounds = array<i64: 1, 1>, scalar_prefetch = 0 : i64, scratch_operands = 1 : i64, tpu.core_type = #tpu.core_type<tc>, window_params = [{transform_indices = @transform_0, window_bounds = array<i64: 8, 16>}, {pipeline_mode = #tpu.pipeline_mode<synchronous>, transform_indices = @transform_1, window_bounds = array<i64: 16, 8>}, {pipeline_mode = #tpu.pipeline_mode<synchronous>, transform_indices = @transform_2, window_bounds = array<i64: 1, 8>}, {pipeline_mode = #tpu.pipeline_mode<synchronous>, transform_indices = @transform_3, window_bounds = array<i64: 8, 16>}, {pipeline_mode = #tpu.pipeline_mode<synchronous>, transform_indices = @transform_4, window_bounds = array<i64: 1, 16>}, {transform_indices = @transform_5, window_bounds = array<i64: 16, 32>}, {transform_indices = @transform_6, window_bounds = array<i64: 1, 32>}, {transform_indices = @transform_7, window_bounds = array<i64: 8, 32>}]} {
    %c0_i32 = arith.constant 0 : i32
    %0 = arith.cmpi eq, %arg1, %c0_i32 : i32
    %1 = arith.extui %0 : i1 to i32
    %c0_i32_0 = arith.constant 0 : i32
    %2 = arith.cmpi ne, %1, %c0_i32_0 : i32
    scf.if %2 {
      %c0_8 = arith.constant 0 : index
      %c0_9 = arith.constant 0 : index
      %10 = vector.load %arg2[%c0_8, %c0_9] : memref<8x16xf32, #tpu.memory_space<vmem>>, vector<8x16xf32>
      %11 = arith.truncf %10 : vector<8x16xf32> to vector<8x16xbf16>
      %c0_10 = arith.constant 0 : index
      %c0_11 = arith.constant 0 : index
      %12 = vector.load %arg3[%c0_10, %c0_11] : memref<16x8xbf16, #tpu.memory_space<vmem>>, vector<16x8xbf16>
      %cst_12 = arith.constant dense<0.000000e+00> : vector<8x8xf32>
      %13 = tpu.matmul %11, %12, %cst_12 {dimension_numbers = #tpu.dot_dimension_numbers<[1], [0], [0], [1], [0, 0, 1, 1], [], []>} : vector<8x16xbf16>, vector<16x8xbf16>, vector<8x8xf32> -> vector<8x8xf32>
      %c0_13 = arith.constant 0 : index
      %c0_14 = arith.constant 0 : index
      %14 = vector.load %arg4[%c0_13, %c0_14] : memref<1x8xf32, #tpu.memory_space<vmem>>, vector<1x8xf32>
      %15 = vector.broadcast %14 : vector<1x8xf32> to vector<8x8xf32>
      %16 = arith.addf %13, %15 : vector<8x8xf32>
      %cst_15 = arith.constant 0.000000e+00 : f32
      %17 = vector.broadcast %cst_15 : f32 to vector<8x8xf32>
      %18 = arith.maximumf %16, %17 : vector<8x8xf32>
      %19 = arith.truncf %18 : vector<8x8xf32> to vector<8x8xbf16>
      %c0_16 = arith.constant 0 : index
      %c0_17 = arith.constant 0 : index
      %20 = vector.load %arg5[%c0_16, %c0_17] : memref<8x16xbf16, #tpu.memory_space<vmem>>, vector<8x16xbf16>
      %cst_18 = arith.constant dense<0.000000e+00> : vector<8x16xf32>
      %21 = tpu.matmul %19, %20, %cst_18 {dimension_numbers = #tpu.dot_dimension_numbers<[1], [0], [0], [1], [0, 0, 1, 1], [], []>} : vector<8x8xbf16>, vector<8x16xbf16>, vector<8x16xf32> -> vector<8x16xf32>
      %c0_19 = arith.constant 0 : index
      %c0_20 = arith.constant 0 : index
      %22 = vector.load %arg6[%c0_19, %c0_20] : memref<1x16xf32, #tpu.memory_space<vmem>>, vector<1x16xf32>
      %23 = vector.broadcast %22 : vector<1x16xf32> to vector<8x16xf32>
      %24 = arith.addf %21, %23 : vector<8x16xf32>
      %25 = arith.addf %24, %10 : vector<8x16xf32>
      %26 = arith.truncf %25 : vector<8x16xf32> to vector<8x16xbf16>
      %c0_21 = arith.constant 0 : index
      %c0_22 = arith.constant 0 : index
      %27 = vector.load %arg10[%c0_21, %c0_22] : memref<8x16xbf16, #tpu.memory_space<vmem>>, vector<8x16xbf16>
      tpu.vector_store %arg10[%c0_21, %c0_22], %26 {strides = array<i32>} : memref<8x16xbf16, #tpu.memory_space<vmem>>, vector<8x16xbf16>,
    } else {
    }
    %c0 = arith.constant 0 : index
    %c0_1 = arith.constant 0 : index
    %3 = vector.load %arg10[%c0, %c0_1] : memref<8x16xbf16, #tpu.memory_space<vmem>>, vector<8x16xbf16>
    %c0_2 = arith.constant 0 : index
    %c0_3 = arith.constant 0 : index
    %4 = vector.load %arg7[%c0_2, %c0_3] : memref<16x32xbf16, #tpu.memory_space<vmem>>, vector<16x32xbf16>
    %cst = arith.constant dense<0.000000e+00> : vector<8x32xf32>
    %5 = tpu.matmul %3, %4, %cst {dimension_numbers = #tpu.dot_dimension_numbers<[1], [0], [0], [1], [0, 0, 1, 1], [], []>} : vector<8x16xbf16>, vector<16x32xbf16>, vector<8x32xf32> -> vector<8x32xf32>
    %c0_4 = arith.constant 0 : index
    %c0_5 = arith.constant 0 : index
    %6 = vector.load %arg8[%c0_4, %c0_5] : memref<1x32xf32, #tpu.memory_space<vmem>>, vector<1x32xf32>
    %7 = vector.broadcast %6 : vector<1x32xf32> to vector<8x32xf32>
    %8 = arith.addf %5, %7 : vector<8x32xf32>
    %c0_6 = arith.constant 0 : index
    %c0_7 = arith.constant 0 : index
    %9 = vector.load %arg9[%c0_6, %c0_7] : memref<8x32xf32, #tpu.memory_space<vmem>>, vector<8x32xf32>
    tpu.vector_store %arg9[%c0_6, %c0_7], %8 {strides = array<i32>} : memref<8x32xf32, #tpu.memory_space<vmem>>, vector<8x32xf32>,
    return
  }
  func.func @transform_0(%arg0: i32, %arg1: i32) -> (i32, i32) {
    %c0_i32 = arith.constant 0 : i32
    %c0_i32_0 = arith.constant 0 : i32
    return %arg0, %c0_i32 : i32, i32
  }
  func.func @transform_1(%arg0: i32, %arg1: i32) -> (i32, i32) {
    %c0_i32 = arith.constant 0 : i32
    %c0_i32_0 = arith.constant 0 : i32
    %c0_i32_1 = arith.constant 0 : i32
    return %c0_i32, %c0_i32_0 : i32, i32
  }
  func.func @transform_2(%arg0: i32, %arg1: i32) -> (i32, i32) {
    %c0_i32 = arith.constant 0 : i32
    %c0_i32_0 = arith.constant 0 : i32
    %c0_i32_1 = arith.constant 0 : i32
    return %c0_i32, %c0_i32_0 : i32, i32
  }
  func.func @transform_3(%arg0: i32, %arg1: i32) -> (i32, i32) {
    %c0_i32 = arith.constant 0 : i32
    %c0_i32_0 = arith.constant 0 : i32
    %c0_i32_1 = arith.constant 0 : i32
    return %c0_i32, %c0_i32_0 : i32, i32
  }
  func.func @transform_4(%arg0: i32, %arg1: i32) -> (i32, i32) {
    %c0_i32 = arith.constant 0 : i32
    %c0_i32_0 = arith.constant 0 : i32
    %c0_i32_1 = arith.constant 0 : i32
    return %c0_i32, %c0_i32_0 : i32, i32
  }
  func.func @transform_5(%arg0: i32, %arg1: i32) -> (i32, i32) {
    %c0_i32 = arith.constant 0 : i32
    %c0_i32_0 = arith.constant 0 : i32
    return %c0_i32, %arg1 : i32, i32
  }
  func.func @transform_6(%arg0: i32, %arg1: i32) -> (i32, i32) {
    %c0_i32 = arith.constant 0 : i32
    %c0_i32_0 = arith.constant 0 : i32
    return %c0_i32, %arg1 : i32, i32
  }
  func.func @transform_7(%arg0: i32, %arg1: i32) -> (i32, i32) {
    %c0_i32 = arith.constant 0 : i32
    return %arg0, %arg1 : i32, i32
  }
}

</mosaic_0001>

<llo_original>
// kernel: kgprompt_forward.5
$region0: #{kgprompt_forward.5}
  #allocation0 [shape = 'u32[]', space=smem, size = 0x4, offset = 0x4, fixed_abs, tag = 'smem constant byte address 0x4 - core index']
  #allocation1 [shape = 'u32[144,128]{1,0:T(1,128)}', space=vmem, size = 0x12000, scoped, tag = 'internal scratch']
  #allocation2 [shape = 'bf16[8,32]{1,0:T(8,128)(2,1)}', space=vmem, size = 0x800, scoped, tag = 'scratch operand']
  %s0 = inlined_call_operand.vmem [shape: f32[16,32], index: 0, kind: input, shape index: {}]
  %s1 = inlined_call_operand.vmem [shape: bf16[32,16], index: 1, kind: input, shape index: {}]
  %s2 = inlined_call_operand.vmem [shape: f32[1,16], index: 2, kind: input, shape index: {}]
  %s3 = inlined_call_operand.vmem [shape: bf16[16,32], index: 3, kind: input, shape index: {}]
  %s4 = inlined_call_operand.vmem [shape: f32[1,32], index: 4, kind: input, shape index: {}]
  %s5 = inlined_call_operand.vmem [shape: bf16[32,64], index: 5, kind: input, shape index: {}]
  %s6 = inlined_call_operand.vmem [shape: f32[1,64], index: 6, kind: input, shape index: {}]
  %s7 = inlined_call_operand.vmem [shape: f32[16,64], index: 7, kind: output, shape index: {}]
  %s8 = sld [smem:[#allocation0]]
  $region65: #{kgprompt_forward.5} parent=0
    _
  %s10 = ssub.s32 1, %s8
  %s11 = scalar_select 0, %s10, %s8
  loop: start=0, step=1, limit=4
  $region2: #{kgprompt_forward.5} parent=0 // loop_pre_header
    _
  $region3: #{kgprompt_forward.5} parent=0 // loop_header
    %s13 = sphi 0, %s17
    %p14 = scmp.ge.s32.totalorder %s13, 4
    %s20 = sphi 0, %s32
    %s21 = sphi 0, %s28
    %s22 = sphi 0, %s20
    %s23 = sphi 0, %s21
    %s24 = sphi 0, %s22
    %s25 = sphi 0, %s23
    %s35 = sphi 0, %s37
    %s38 = sphi 0, %s35
    %s39 = sphi 0, %s38
    %s55 = sphi 0, %s39
    %s59 = sphi 0, %s59
    %s61 = sphi 0, %s59
    %s62 = sphi 0, %s61
    %s76 = sphi 0, %s62
    %s80 = sphi 0, %s80
    %s82 = sphi 0, %s80
    %s83 = sphi 0, %s82
    %s97 = sphi 0, %s83
    %s101 = sphi 0, %s101
    %s103 = sphi 0, %s101
    %s104 = sphi 0, %s103
    %s118 = sphi 0, %s104
    %s122 = sphi 0, %s122
    %s124 = sphi 0, %s122
    %s125 = sphi 0, %s124
    %s139 = sphi 0, %s125
    %s145 = sphi 0, %s147
    %s148 = sphi 0, %s145
    %s149 = sphi 0, %s148
    %s165 = sphi 0, %s149
    %s171 = sphi 0, %s173
    %s174 = sphi 0, %s171
    %s175 = sphi 0, %s174
    %s191 = sphi 0, %s175
    %s199 = sphi 0, %s201
    %s202 = sphi 0, %s199
    %s203 = sphi 0, %s202
    %s219 = sphi 0, %s203
  $region4: #{kgprompt_forward.5} parent=0 // loop_header_branch
    %16 = sbr.rel (%p14) target = $region8
  $region5: #{kgprompt_forward.5} parent=0 // loop_body
    %s18 = ssub.s32 %s13, 1
    %s19 = ssub.s32 %s13, 2
    %s26 = sadd.s32 1, %s21
    %p27 = scmp.ge.s32.totalorder %s26, 1
    %s28 = scalar_select %p27, 0, %s26
    %s29 = sadd.s32 1, %s20
    %s30 = scalar_select %p27, %s29, %s20
    %p31 = scmp.ge.s32.totalorder %s30, 2
    %s32 = scalar_select %p31, 0, %s30
    %s33 = ssub.s32 %s20, %s32
    %p34 = scmp.eq.s32.totalorder %s33, 0
    %s36 = sadd.s32 %s35, 1
    %s37 = scalar_select %p34, %s35, %s36
    %p40 = pneg %p34
    %p41 = scmp.eq.s32.totalorder %s13, 1
    %p42 = por %p40, %p41
    %p43 = scmp.ne.s32.totalorder %s35, %s38
    %p44 = scmp.eq.s32.totalorder %s13, 0
    %p45 = por %p43, %p44
    %p46 = scmp.ne.s32.totalorder %s35, %s38
    %p47 = scmp.eq.s32.totalorder %s18, 1
    %p48 = por %p46, %p47
    %p49 = scmp.ne.s32.totalorder %s38, %s39
    %p50 = scmp.eq.s32.totalorder %s18, 0
    %p51 = por %p49, %p50
    %p52 = scmp.ne.s32.totalorder %s38, %s39
    %p53 = scmp.eq.s32.totalorder %s19, 1
    %p54 = por %p52, %p53
    %p56 = scmp.ne.s32.totalorder %s39, %s55
    %p57 = scmp.eq.s32.totalorder %s19, 0
    %p58 = por %p56, %p57
    %s60 = sadd.s32 %s59, 1
    %p63 = scmp.eq.s32.totalorder %s13, 1
    %p64 = scmp.ne.s32.totalorder %s59, %s61
    %p65 = scmp.eq.s32.totalorder %s13, 0
    %p66 = por %p64, %p65
    %p67 = scmp.ne.s32.totalorder %s59, %s61
    %p68 = scmp.eq.s32.totalorder %s18, 1
    %p69 = por %p67, %p68
    %p70 = scmp.ne.s32.totalorder %s61, %s62
    %p71 = scmp.eq.s32.totalorder %s18, 0
    %p72 = por %p70, %p71
    %p73 = scmp.ne.s32.totalorder %s61, %s62
    %p74 = scmp.eq.s32.totalorder %s19, 1
    %p75 = por %p73, %p74
    %p77 = scmp.ne.s32.totalorder %s62, %s76
    %p78 = scmp.eq.s32.totalorder %s19, 0
    %p79 = por %p77, %p78
    %s81 = sadd.s32 %s80, 1
    %p84 = scmp.eq.s32.totalorder %s13, 1
    %p85 = scmp.ne.s32.totalorder %s80, %s82
    %p86 = scmp.eq.s32.totalorder %s13, 0
    %p87 = por %p85, %p86
    %p88 = scmp.ne.s32.totalorder %s80, %s82
    %p89 = scmp.eq.s32.totalorder %s18, 1
    %p90 = por %p88, %p89
    %p91 = scmp.ne.s32.totalorder %s82, %s83
    %p92 = scmp.eq.s32.totalorder %s18, 0
    %p93 = por %p91, %p92
    %p94 = scmp.ne.s32.totalorder %s82, %s83
    %p95 = scmp.eq.s32.totalorder %s19, 1
    %p96 = por %p94, %p95
    %p98 = scmp.ne.s32.totalorder %s83, %s97
    %p99 = scmp.eq.s32.totalorder %s19, 0
    %p100 = por %p98, %p99
    %s102 = sadd.s32 %s101, 1
    %p105 = scmp.eq.s32.totalorder %s13, 1
    %p106 = scmp.ne.s32.totalorder %s101, %s103
    %p107 = scmp.eq.s32.totalorder %s13, 0
    %p108 = por %p106, %p107
    %p109 = scmp.ne.s32.totalorder %s101, %s103
    %p110 = scmp.eq.s32.totalorder %s18, 1
    %p111 = por %p109, %p110
    %p112 = scmp.ne.s32.totalorder %s103, %s104
    %p113 = scmp.eq.s32.totalorder %s18, 0
    %p114 = por %p112, %p113
    %p115 = scmp.ne.s32.totalorder %s103, %s104
    %p116 = scmp.eq.s32.totalorder %s19, 1
    %p117 = por %p115, %p116
    %p119 = scmp.ne.s32.totalorder %s104, %s118
    %p120 = scmp.eq.s32.totalorder %s19, 0
    %p121 = por %p119, %p120
    %s123 = sadd.s32 %s122, 1
    %p126 = scmp.eq.s32.totalorder %s13, 1
    %p127 = scmp.ne.s32.totalorder %s122, %s124
    %p128 = scmp.eq.s32.totalorder %s13, 0
    %p129 = por %p127, %p128
    %p130 = scmp.ne.s32.totalorder %s122, %s124
    %p131 = scmp.eq.s32.totalorder %s18, 1
    %p132 = por %p130, %p131
    %p133 = scmp.ne.s32.totalorder %s124, %s125
    %p134 = scmp.eq.s32.totalorder %s18, 0
    %p135 = por %p133, %p134
    %p136 = scmp.ne.s32.totalorder %s124, %s125
    %p137 = scmp.eq.s32.totalorder %s19, 1
    %p138 = por %p136, %p137
    %p140 = scmp.ne.s32.totalorder %s125, %s139
    %p141 = scmp.eq.s32.totalorder %s19, 0
    %p142 = por %p140, %p141
    %s143 = ssub.s32 %s21, %s28
    %p144 = scmp.eq.s32.totalorder %s143, 0
    %s146 = sadd.s32 %s145, 1
    %s147 = scalar_select %p144, %s145, %s146
    %p150 = pneg %p144
    %p151 = scmp.eq.s32.totalorder %s13, 1
    %p152 = por %p150, %p151
    %p153 = scmp.ne.s32.totalorder %s145, %s148
    %p154 = scmp.eq.s32.totalorder %s13, 0
    %p155 = por %p153, %p154
    %p156 = scmp.ne.s32.totalorder %s145, %s148
    %p157 = scmp.eq.s32.totalorder %s18, 1
    %p158 = por %p156, %p157
    %p159 = scmp.ne.s32.totalorder %s148, %s149
    %p160 = scmp.eq.s32.totalorder %s18, 0
    %p161 = por %p159, %p160
    %p162 = scmp.ne.s32.totalorder %s148, %s149
    %p163 = scmp.eq.s32.totalorder %s19, 1
    %p164 = por %p162, %p163
    %p166 = scmp.ne.s32.totalorder %s149, %s165
    %p167 = scmp.eq.s32.totalorder %s19, 0
    %p168 = por %p166, %p167
    %s169 = ssub.s32 %s21, %s28
    %p170 = scmp.eq.s32.totalorder %s169, 0
    %s172 = sadd.s32 %s171, 1
    %s173 = scalar_select %p170, %s171, %s172
    %p176 = pneg %p170
    %p177 = scmp.eq.s32.totalorder %s13, 1
    %p178 = por %p176, %p177
    %p179 = scmp.ne.s32.totalorder %s171, %s174
    %p180 = scmp.eq.s32.totalorder %s13, 0
    %p181 = por %p179, %p180
    %p182 = scmp.ne.s32.totalorder %s171, %s174
    %p183 = scmp.eq.s32.totalorder %s18, 1
    %p184 = por %p182, %p183
    %p185 = scmp.ne.s32.totalorder %s174, %s175
    %p186 = scmp.eq.s32.totalorder %s18, 0
    %p187 = por %p185, %p186
    %p188 = scmp.ne.s32.totalorder %s174, %s175
    %p189 = scmp.eq.s32.totalorder %s19, 1
    %p190 = por %p188, %p189
    %p192 = scmp.ne.s32.totalorder %s175, %s191
    %p193 = scmp.eq.s32.totalorder %s19, 0
    %p194 = por %p192, %p193
    %s195 = ssub.s32 %s20, %s32
    %s196 = ssub.s32 %s21, %s28
    %s197 = sor.u32 %s195, %s196
    %p198 = scmp.eq.s32.totalorder %s197, 0
    %s200 = sadd.s32 %s199, 1
    %s201 = scalar_select %p198, %s199, %s200
    %p204 = pneg %p198
    %p205 = scmp.eq.s32.totalorder %s13, 1
    %p206 = por %p204, %p205
    %p207 = scmp.ne.s32.totalorder %s199, %s202
    %p208 = scmp.eq.s32.totalorder %s13, 0
    %p209 = por %p207, %p208
    %p210 = scmp.ne.s32.totalorder %s199, %s202
    %p211 = scmp.eq.s32.totalorder %s18, 1
    %p212 = por %p210, %p211
    %p213 = scmp.ne.s32.totalorder %s202, %s203
    %p214 = scmp.eq.s32.totalorder %s18, 0
    %p215 = por %p213, %p214
    %p216 = scmp.ne.s32.totalorder %s202, %s203
    %p217 = scmp.eq.s32.totalorder %s19, 1
    %p218 = por %p216, %p217
    %p220 = scmp.ne.s32.totalorder %s203, %s219
    %p221 = scmp.eq.s32.totalorder %s19, 0
    %p222 = por %p220, %p221
    %p223 = scmp.le.s32.totalorder 1, %s13
    %p224 = scmp.lt.s32.totalorder %s13, 3
    %p225 = pnand %p223, %p224
    %p226 = pneg %p225
    // Predicated region
    $region9: #{kgprompt_forward.5} parent=5 // pred_check
      _
    $region10: #{kgprompt_forward.5} parent=5 // pred_check_branch
      %228 = sbr.rel (%p225) target = $region12
    $region11: #{kgprompt_forward.5} parent=5 // pred_region
      %s229 = ssub.s32 %s13, 1
      // Predicated region
      $region13: #{kgprompt_forward.5} parent=11 // pred_check
        %p230 = pneg %p72
      $region14: #{kgprompt_forward.5} parent=11 // pred_check_branch
        %232 = sbr.rel (%p230) target = $region16
      $region15: #{kgprompt_forward.5} parent=11 // pred_region
        _
      $region16: #{kgprompt_forward.5} parent=11 // pred_fallthru
        _
      // Predicated region
      $region17: #{kgprompt_forward.5} parent=11 // pred_check
        %p233 = pneg %p93
      $region18: #{kgprompt_forward.5} parent=11 // pred_check_branch
        %235 = sbr.rel (%p233) target = $region20
      $region19: #{kgprompt_forward.5} parent=11 // pred_region
        _
      $region20: #{kgprompt_forward.5} parent=11 // pred_fallthru
        _
      // Predicated region
      $region21: #{kgprompt_forward.5} parent=11 // pred_check
        %p236 = pneg %p114
      $region22: #{kgprompt_forward.5} parent=11 // pred_check_branch
        %238 = sbr.rel (%p236) target = $region24
      $region23: #{kgprompt_forward.5} parent=11 // pred_region
        _
      $region24: #{kgprompt_forward.5} parent=11 // pred_fallthru
        _
      // Predicated region
      $region25: #{kgprompt_forward.5} parent=11 // pred_check
        %p239 = pneg %p135
      $region26: #{kgprompt_forward.5} parent=11 // pred_check_branch
        %241 = sbr.rel (%p239) target = $region28
      $region27: #{kgprompt_forward.5} parent=11 // pred_region
        _
      $region28: #{kgprompt_forward.5} parent=11 // pred_fallthru
        _
      // Predicated region
      $region29: #{kgprompt_forward.5} parent=11 // pred_check
        %p242 = pneg %p161
      $region30: #{kgprompt_forward.5} parent=11 // pred_check_branch
        %244 = sbr.rel (%p242) target = $region32
      $region31: #{kgprompt_forward.5} parent=11 // pred_region
        %p245 = scmp.lt.s32.totalorder %s23, 0
        %s246 = scalar_select %p245, %s23, 0
        %s247 = smul.addr %s246, 4
        %s248 = scalar_lea.vmem %s5, %s247
      $region32: #{kgprompt_forward.5} parent=11 // pred_fallthru
        _
      // Predicated region
      $region33: #{kgprompt_forward.5} parent=11 // pred_check
        %p249 = pneg %p187
      $region34: #{kgprompt_forward.5} parent=11 // pred_check_branch
        %251 = sbr.rel (%p249) target = $region36
      $region35: #{kgprompt_forward.5} parent=11 // pred_region
        %p252 = scmp.lt.s32.totalorder %s23, 0
        %s253 = scalar_select %p252, %s23, 0
        %s254 = scalar_lea.vmem %s6, %s253
      $region36: #{kgprompt_forward.5} parent=11 // pred_fallthru
        _
    $region12: #{kgprompt_forward.5} parent=5 // pred_fallthru
      _
    %p255 = scmp.lt.s32.totalorder %s13, 2
    // Predicated region
    $region37: #{kgprompt_forward.5} parent=5 // pred_check
      %p256 = pneg %p255
    $region38: #{kgprompt_forward.5} parent=5 // pred_check_branch
      %258 = sbr.rel (%p256) target = $region40
    $region39: #{kgprompt_forward.5} parent=5 // pred_region
      // Predicated region
      $region41: #{kgprompt_forward.5} parent=39 // pred_check
        %p259 = pneg %p45
      $region42: #{kgprompt_forward.5} parent=39 // pred_check_branch
        %261 = sbr.rel (%p259) target = $region44
      $region43: #{kgprompt_forward.5} parent=39 // pred_region
        %p262 = scmp.lt.s32.totalorder %s20, 1
        %s263 = scalar_select %p262, %s20, 1
        %s264 = smul.addr %s263, 8
        %s265 = scalar_lea.vmem %s0, %s264
      $region44: #{kgprompt_forward.5} parent=39 // pred_fallthru
        _
    $region40: #{kgprompt_forward.5} parent=5 // pred_fallthru
      _
    %p266 = scmp.le.s32.totalorder 1, %s13
    %p267 = scmp.lt.s32.totalorder %s13, 3
    %p268 = pnand %p266, %p267
    %p269 = pneg %p268
    // Predicated region
    $region45: #{kgprompt_forward.5} parent=5 // pred_check
      _
    $region46: #{kgprompt_forward.5} parent=5 // pred_check_branch
      %271 = sbr.rel (%p268) target = $region48
    $region47: #{kgprompt_forward.5} parent=5 // pred_region
      %s272 = ssub.s32 %s13, 1
      %p273 = scmp.lt.s32.totalorder %s22, 1
      %s274 = scalar_select %p273, %s22, 1
      %s275 = smul.addr %s274, 8
      %s276 = scalar_lea.vmem %s0, %s275
      %p277 = pneg %p51
      %p278 = pneg %p48
      %p279 = pneg %p72
      %p280 = pneg %p69
      %p281 = pneg %p93
      %p282 = pneg %p90
      %p283 = pneg %p114
      %p284 = pneg %p111
      %p285 = pneg %p135
      %p286 = pneg %p132
      %p287 = scmp.lt.s32.totalorder %s23, 0
      %s288 = scalar_select %p287, %s23, 0
      %s289 = smul.addr %s288, 4
      %s290 = scalar_lea.vmem %s5, %s289
      %p291 = pneg %p161
      %p292 = pneg %p158
      %p293 = scmp.lt.s32.totalorder %s23, 0
      %s294 = scalar_select %p293, %s23, 0
      %s295 = scalar_lea.vmem %s6, %s294
      %p296 = pneg %p187
      %p297 = pneg %p184
      %p298 = pneg %p215
      %p299 = pneg %p212
      %p300 = scmp.lt.s32.totalorder %s22, 1
      %s301 = scalar_select %p300, %s22, 1
      %p302 = scmp.lt.s32.totalorder %s23, 0
      %s303 = scalar_select %p302, %s23, 0
      %s304 = sadd.s32 %s303, %s301
      %s305 = smul.addr %s304, 8
      %s306 = scalar_lea.vmem %s7, %s305
      %p307 = scmp.lt.s32.totalorder %s22, 1
      %s308 = scalar_select %p307, %s22, 1
      %s309 = smul.addr %s308, 8
      %s310 = scalar_lea.vmem %s0, %s309
      %p311 = scmp.lt.s32.totalorder %s23, 0
      %s312 = scalar_select %p311, %s23, 0
      %s313 = smul.addr %s312, 4
      %s314 = scalar_lea.vmem %s5, %s313
      %p315 = scmp.lt.s32.totalorder %s23, 0
      %s316 = scalar_select %p315, %s23, 0
      %s317 = scalar_lea.vmem %s6, %s316
      %p318 = scmp.lt.s32.totalorder %s22, 1
      %s319 = scalar_select %p318, %s22, 1
      %p320 = scmp.lt.s32.totalorder %s23, 0
      %s321 = scalar_select %p320, %s23, 0
      %s322 = sadd.s32 %s321, %s319
      %s323 = smul.addr %s322, 8
      %s324 = scalar_lea.vmem %s7, %s323
      %p326 = scmp.eq.s32.totalorder %s23, 0
      // Predicated region
      $region49: #{kgprompt_forward.5} parent=47 // pred_check
        %p327 = pneg %p326
      $region50: #{kgprompt_forward.5} parent=47 // pred_check_branch
        %329 = sbr.rel (%p327) target = $region52
      $region51: #{kgprompt_forward.5} parent=47 // pred_region
        %v330 = vld [vmem:[%s310] sm:$0xff]
        %v331 = vpack.c.bf16 %v330, %v330
        %v332 = vld [vmem:[%s1] sm:$0xf]
        %v333 = vld [vmem:[%s1 + $0x4] sm:$0xf]
        %v334 = vld [vmem:[%s1 + $0x8] sm:$0xf]
        %v335 = vld [vmem:[%s1 + $0xc] sm:$0xf]
        %v336 = vld [vmem:[%s2] sm:$0x1]
        %v338 = vlaneseq
        %v339 = vshrl.u32 %v338, 7
        %v340 = vsub.s32 0, %v339
        %v341 = vrot.slane %v336, %v340
        %v347 = vunpack.c.l.b16 %v332
        %v348 = vunpack.c.l.b16 %v333
        %v349 = vunpack.c.l.b16 %v334
        %v350 = vunpack.c.l.b16 %v335
        %v351 = vpack.c.b16 %v348, %v347
        %v352 = vpack.c.b16 %v350, %v349
        %vm355 = vcmask 261120
        %v357 = vsel %vm355, %v331, 0
        %359 = vmatprep.subr.bf16.mxu0 0
        %360 = vmatpush1.bf16.msra.mxu0 %v351
        %361 = vmatprep.subr.bf16.mxu0 0
        %362 = vmatpush1.bf16.msra.mxu0 %v352
        %363 = vmatprep.subr.bf16.mxu0 0
        %364 = vmatpush1.bf16.msra.mxu0 0
        %365 = vmatprep.subr.bf16.mxu0 0
        %366 = vmatpush1.bf16.msra.mxu0 0
        %367 = vmatprep.subr.bf16.mxu0 0
        %368 = vmatpush1.bf16.msra.mxu0 0
        %369 = vmatprep.subr.bf16.mxu0 0
        %370 = vmatpush1.bf16.msra.mxu0 0
        %371 = vmatprep.subr.bf16.mxu0 0
        %372 = vmatpush1.bf16.msra.mxu0 0
        %373 = vmatprep.subr.bf16.mxu0 0
        %374 = vmatpush1.bf16.msra.mxu0 0
        %375 = vmatprep.subr.bf16.mxu0 0
        %376 = vmatpush1.bf16.msra.mxu0 0
        %377 = vmatprep.subr.bf16.mxu0 0
        %378 = vmatpush1.bf16.msra.mxu0 0
        %379 = vmatprep.subr.bf16.mxu0 0
        %380 = vmatpush1.bf16.msra.mxu0 0
        %381 = vmatprep.subr.bf16.mxu0 0
        %382 = vmatpush1.bf16.msra.mxu0 0
        %383 = vmatprep.subr.bf16.mxu0 0
        %384 = vmatpush1.bf16.msra.mxu0 0
        %385 = vmatprep.subr.bf16.mxu0 0
        %386 = vmatpush1.bf16.msra.mxu0 0
        %387 = vmatprep.subr.bf16.mxu0 0
        %388 = vmatpush1.bf16.msra.mxu0 0
        %389 = vmatprep.subr.bf16.mxu0 0
        %390 = vmatpush1.bf16.msra.mxu0 0
        %391 = vmatprep.mubr.bf16.mxu0 0
        %392 = vmatmul.mubr.bf16.gmra.mrb[0].mxu0 %v357
        %v393 = vpop.f32.mrb[0].mxu0
        %v394 = vadd.f32 %v341, %v393
        %v395 = vpop.f32.mrb[0].mxu0
        %v396 = vpop.f32.mrb[0].mxu0
        %v397 = vpop.f32.mrb[0].mxu0
        %398 = vdwg.mxu0
        %v399 = vmax.f32 %v394, 0.0
        %v400 = vpack.c.bf16 %v399, %v399
        %v401 = vld [vmem:[%s3] sm:$0xf]
        %v402 = vld [vmem:[%s3 + $0x4] sm:$0xf]
        %v403 = vld [vmem:[%s4] sm:$0x1]
        %v405 = vlaneseq
        %v406 = vshrl.u32 %v405, 7
        %v407 = vsub.s32 0, %v406
        %v408 = vrot.slane %v403, %v407
        %v412 = vunpack.c.l.b16 %v401
        %v413 = vunpack.c.l.b16 %v402
        %v414 = vpack.c.b16 %v413, %v412
        %vm416 = vcmask 130048
        %v418 = vsel %vm416, %v400, 0
        %420 = vmatprep.subr.bf16.mxu0 0
        %421 = vmatpush1.bf16.msra.mxu0 %v414
        %422 = vmatprep.subr.bf16.mxu0 0
        %423 = vmatpush1.bf16.msra.mxu0 0
        %424 = vmatprep.subr.bf16.mxu0 0
        %425 = vmatpush1.bf16.msra.mxu0 0
        %426 = vmatprep.subr.bf16.mxu0 0
        %427 = vmatpush1.bf16.msra.mxu0 0
        %428 = vmatprep.subr.bf16.mxu0 0
        %429 = vmatpush1.bf16.msra.mxu0 0
        %430 = vmatprep.subr.bf16.mxu0 0
        %431 = vmatpush1.bf16.msra.mxu0 0
        %432 = vmatprep.subr.bf16.mxu0 0
        %433 = vmatpush1.bf16.msra.mxu0 0
        %434 = vmatprep.subr.bf16.mxu0 0
        %435 = vmatpush1.bf16.msra.mxu0 0
        %436 = vmatprep.subr.bf16.mxu0 0
        %437 = vmatpush1.bf16.msra.mxu0 0
        %438 = vmatprep.subr.bf16.mxu0 0
        %439 = vmatpush1.bf16.msra.mxu0 0
        %440 = vmatprep.subr.bf16.mxu0 0
        %441 = vmatpush1.bf16.msra.mxu0 0
        %442 = vmatprep.subr.bf16.mxu0 0
        %443 = vmatpush1.bf16.msra.mxu0 0
        %444 = vmatprep.subr.bf16.mxu0 0
        %445 = vmatpush1.bf16.msra.mxu0 0
        %446 = vmatprep.subr.bf16.mxu0 0
        %447 = vmatpush1.bf16.msra.mxu0 0
        %448 = vmatprep.subr.bf16.mxu0 0
        %449 = vmatpush1.bf16.msra.mxu0 0
        %450 = vmatprep.subr.bf16.mxu0 0
        %451 = vmatpush1.bf16.msra.mxu0 0
        %452 = vmatprep.mubr.bf16.mxu0 0
        %453 = vmatmul.mubr.bf16.gmra.mrb[0].mxu0 %v418
        %v454 = vpop.f32.mrb[0].mxu0
        %v455 = vadd.f32 %v408, %v454
        %v456 = vpop.f32.mrb[0].mxu0
        %v457 = vpop.f32.mrb[0].mxu0
        %v458 = vpop.f32.mrb[0].mxu0
        %459 = vdwg.mxu0
        %v460 = vadd.f32 %v455, %v330
        %v461 = vpack.c.bf16 %v460, %v460
        %vm462 = vcmask 257024
        %463 = vst.msk [vmem:[#allocation2] sm:$0xf] %vm462, %v461
      $region52: #{kgprompt_forward.5} parent=47 // pred_fallthru
        _
      %v464 = vld [vmem:[#allocation2] sm:$0xf]
      %v465 = vld [vmem:[%s314] sm:$0xf]
      %v466 = vld [vmem:[%s314 + $0x4] sm:$0xf]
      %v467 = vld [vmem:[%s314 + $0x8] sm:$0xf]
      %v468 = vld [vmem:[%s314 + $0xc] sm:$0xf]
      %v469 = vld [vmem:[%s317] sm:$0x1]
      %v471 = vlaneseq
      %v472 = vshrl.u32 %v471, 7
      %v473 = vsub.s32 0, %v472
      %v474 = vrot.slane %v469, %v473
      %v480 = vunpack.c.l.b16 %v465
      %v481 = vunpack.c.l.b16 %v466
      %v482 = vunpack.c.l.b16 %v467
      %v483 = vunpack.c.l.b16 %v468
      %v484 = vpack.c.b16 %v481, %v480
      %v485 = vpack.c.b16 %v483, %v482
      %vm488 = vcmask 261120
      %v490 = vsel %vm488, %v464, 0
      %492 = vmatprep.subr.bf16.mxu0 0
      %493 = vmatpush1.bf16.msra.mxu0 %v484
      %494 = vmatprep.subr.bf16.mxu0 0
      %495 = vmatpush1.bf16.msra.mxu0 %v485
      %496 = vmatprep.subr.bf16.mxu0 0
      %497 = vmatpush1.bf16.msra.mxu0 0
      %498 = vmatprep.subr.bf16.mxu0 0
      %499 = vmatpush1.bf16.msra.mxu0 0
      %500 = vmatprep.subr.bf16.mxu0 0
      %501 = vmatpush1.bf16.msra.mxu0 0
      %502 = vmatprep.subr.bf16.mxu0 0
      %503 = vmatpush1.bf16.msra.mxu0 0
      %504 = vmatprep.subr.bf16.mxu0 0
      %505 = vmatpush1.bf16.msra.mxu0 0
      %506 = vmatprep.subr.bf16.mxu0 0
      %507 = vmatpush1.bf16.msra.mxu0 0
      %508 = vmatprep.subr.bf16.mxu0 0
      %509 = vmatpush1.bf16.msra.mxu0 0
      %510 = vmatprep.subr.bf16.mxu0 0
      %511 = vmatpush1.bf16.msra.mxu0 0
      %512 = vmatprep.subr.bf16.mxu0 0
      %513 = vmatpush1.bf16.msra.mxu0 0
      %514 = vmatprep.subr.bf16.mxu0 0
      %515 = vmatpush1.bf16.msra.mxu0 0
      %516 = vmatprep.subr.bf16.mxu0 0
      %517 = vmatpush1.bf16.msra.mxu0 0
      %518 = vmatprep.subr.bf16.mxu0 0
      %519 = vmatpush1.bf16.msra.mxu0 0
      %520 = vmatprep.subr.bf16.mxu0 0
      %521 = vmatpush1.bf16.msra.mxu0 0
      %522 = vmatprep.subr.bf16.mxu0 0
      %523 = vmatpush1.bf16.msra.mxu0 0
      %524 = vmatprep.mubr.bf16.mxu0 0
      %525 = vmatmul.mubr.bf16.gmra.mrb[0].mxu0 %v490
      %v526 = vpop.f32.mrb[0].mxu0
      %v527 = vadd.f32 %v474, %v526
      %v528 = vpop.f32.mrb[0].mxu0
      %v529 = vpop.f32.mrb[0].mxu0
      %v530 = vpop.f32.mrb[0].mxu0
      %531 = vdwg.mxu0
      %vm532 = vcmask 523264
      %533 = vst.msk [vmem:[%s324] sm:$0xff] %vm532, %v527
      %p534 = scmp.lt.s32.totalorder %s22, 1
      %s535 = scalar_select %p534, %s22, 1
      %p536 = scmp.lt.s32.totalorder %s23, 0
      %s537 = scalar_select %p536, %s23, 0
      %s538 = sadd.s32 %s537, %s535
      %s539 = smul.addr %s538, 8
      %s540 = scalar_lea.vmem %s7, %s539
      // Predicated region
      $region53: #{kgprompt_forward.5} parent=47 // pred_check
        %p541 = pneg %p212
      $region54: #{kgprompt_forward.5} parent=47 // pred_check_branch
        %543 = sbr.rel (%p541) target = $region56
      $region55: #{kgprompt_forward.5} parent=47 // pred_region
        _
      $region56: #{kgprompt_forward.5} parent=47 // pred_fallthru
        _
    $region48: #{kgprompt_forward.5} parent=5 // pred_fallthru
      _
    %p544 = scmp.le.s32.totalorder 2, %s13
    // Predicated region
    $region57: #{kgprompt_forward.5} parent=5 // pred_check
      %p545 = pneg %p544
    $region58: #{kgprompt_forward.5} parent=5 // pred_check_branch
      %547 = sbr.rel (%p545) target = $region60
    $region59: #{kgprompt_forward.5} parent=5 // pred_region
      %s548 = ssub.s32 %s13, 2
      // Predicated region
      $region61: #{kgprompt_forward.5} parent=59 // pred_check
        %p549 = pneg %p218
      $region62: #{kgprompt_forward.5} parent=59 // pred_check_branch
        %551 = sbr.rel (%p549) target = $region64
      $region63: #{kgprompt_forward.5} parent=59 // pred_region
        %p552 = scmp.lt.s32.totalorder %s24, 1
        %s553 = scalar_select %p552, %s24, 1
        %p554 = scmp.lt.s32.totalorder %s25, 0
        %s555 = scalar_select %p554, %s25, 0
        %s556 = sadd.s32 %s555, %s553
        %s557 = smul.addr %s556, 8
        %s558 = scalar_lea.vmem %s7, %s557
      $region64: #{kgprompt_forward.5} parent=59 // pred_fallthru
        _
    $region60: #{kgprompt_forward.5} parent=5 // pred_fallthru
      _
  $region6: #{kgprompt_forward.5} parent=0 // loop_footer
    %s17 = sadd.s32 1, %s13
  $region7: #{kgprompt_forward.5} parent=0 // loop_footer_branch
    %12 = sbr.rel target = $region3
  $region8: #{kgprompt_forward.5} parent=0 // loop_exit
    _

// kernel: kgprompt_forward.7
$region0: #{kgprompt_forward.7}
  #allocation0 [shape = 'u32[]', space=smem, size = 0x4, offset = 0x4, fixed_abs, tag = 'smem constant byte address 0x4 - core index']
  #allocation1 [shape = 'u32[144,128]{1,0:T(1,128)}', space=vmem, size = 0x12000, scoped, tag = 'internal scratch']
  #allocation2 [shape = 'bf16[8,32]{1,0:T(8,128)(2,1)}', space=vmem, size = 0x800, scoped, tag = 'scratch operand']
  %s0 = inlined_call_operand.vmem [shape: f32[16,32], index: 0, kind: input, shape index: {}]
  %s1 = inlined_call_operand.vmem [shape: bf16[32,16], index: 1, kind: input, shape index: {}]
  %s2 = inlined_call_operand.vmem [shape: f32[1,16], index: 2, kind: input, shape index: {}]
  %s3 = inlined_call_operand.vmem [shape: bf16[16,32], index: 3, kind: input, shape index: {}]
  %s4 = inlined_call_operand.vmem [shape: f32[1,32], index: 4, kind: input, shape index: {}]
  %s5 = inlined_call_operand.vmem [shape: bf16[32,128], index: 5, kind: input, shape index: {}]
  %s6 = inlined_call_operand.vmem [shape: f32[1,128], index: 6, kind: input, shape index: {}]
  %s7 = inlined_call_operand.vmem [shape: bf16[16,128], index: 7, kind: output, shape index: {}]
  %s8 = sld [smem:[#allocation0]]
  $region65: #{kgprompt_forward.7} parent=0
    _
  %s10 = ssub.s32 1, %s8
  %s11 = scalar_select 0, %s10, %s8
  loop: start=0, step=1, limit=4
  $region2: #{kgprompt_forward.7} parent=0 // loop_pre_header
    _
  $region3: #{kgprompt_forward.7} parent=0 // loop_header
    %s13 = sphi 0, %s17
    %p14 = scmp.ge.s32.totalorder %s13, 4
    %s20 = sphi 0, %s32
    %s21 = sphi 0, %s28
    %s22 = sphi 0, %s20
    %s23 = sphi 0, %s21
    %s24 = sphi 0, %s22
    %s25 = sphi 0, %s23
    %s35 = sphi 0, %s37
    %s38 = sphi 0, %s35
    %s39 = sphi 0, %s38
    %s55 = sphi 0, %s39
    %s59 = sphi 0, %s59
    %s61 = sphi 0, %s59
    %s62 = sphi 0, %s61
    %s76 = sphi 0, %s62
    %s80 = sphi 0, %s80
    %s82 = sphi 0, %s80
    %s83 = sphi 0, %s82
    %s97 = sphi 0, %s83
    %s101 = sphi 0, %s101
    %s103 = sphi 0, %s101
    %s104 = sphi 0, %s103
    %s118 = sphi 0, %s104
    %s122 = sphi 0, %s122
    %s124 = sphi 0, %s122
    %s125 = sphi 0, %s124
    %s139 = sphi 0, %s125
    %s145 = sphi 0, %s147
    %s148 = sphi 0, %s145
    %s149 = sphi 0, %s148
    %s165 = sphi 0, %s149
    %s171 = sphi 0, %s173
    %s174 = sphi 0, %s171
    %s175 = sphi 0, %s174
    %s191 = sphi 0, %s175
    %s199 = sphi 0, %s201
    %s202 = sphi 0, %s199
    %s203 = sphi 0, %s202
    %s219 = sphi 0, %s203
  $region4: #{kgprompt_forward.7} parent=0 // loop_header_branch
    %16 = sbr.rel (%p14) target = $region8
  $region5: #{kgprompt_forward.7} parent=0 // loop_body
    %s18 = ssub.s32 %s13, 1
    %s19 = ssub.s32 %s13, 2
    %s26 = sadd.s32 1, %s21
    %p27 = scmp.ge.s32.totalorder %s26, 1
    %s28 = scalar_select %p27, 0, %s26
    %s29 = sadd.s32 1, %s20
    %s30 = scalar_select %p27, %s29, %s20
    %p31 = scmp.ge.s32.totalorder %s30, 2
    %s32 = scalar_select %p31, 0, %s30
    %s33 = ssub.s32 %s20, %s32
    %p34 = scmp.eq.s32.totalorder %s33, 0
    %s36 = sadd.s32 %s35, 1
    %s37 = scalar_select %p34, %s35, %s36
    %p40 = pneg %p34
    %p41 = scmp.eq.s32.totalorder %s13, 1
    %p42 = por %p40, %p41
    %p43 = scmp.ne.s32.totalorder %s35, %s38
    %p44 = scmp.eq.s32.totalorder %s13, 0
    %p45 = por %p43, %p44
    %p46 = scmp.ne.s32.totalorder %s35, %s38
    %p47 = scmp.eq.s32.totalorder %s18, 1
    %p48 = por %p46, %p47
    %p49 = scmp.ne.s32.totalorder %s38, %s39
    %p50 = scmp.eq.s32.totalorder %s18, 0
    %p51 = por %p49, %p50
    %p52 = scmp.ne.s32.totalorder %s38, %s39
    %p53 = scmp.eq.s32.totalorder %s19, 1
    %p54 = por %p52, %p53
    %p56 = scmp.ne.s32.totalorder %s39, %s55
    %p57 = scmp.eq.s32.totalorder %s19, 0
    %p58 = por %p56, %p57
    %s60 = sadd.s32 %s59, 1
    %p63 = scmp.eq.s32.totalorder %s13, 1
    %p64 = scmp.ne.s32.totalorder %s59, %s61
    %p65 = scmp.eq.s32.totalorder %s13, 0
    %p66 = por %p64, %p65
    %p67 = scmp.ne.s32.totalorder %s59, %s61
    %p68 = scmp.eq.s32.totalorder %s18, 1
    %p69 = por %p67, %p68
    %p70 = scmp.ne.s32.totalorder %s61, %s62
    %p71 = scmp.eq.s32.totalorder %s18, 0
    %p72 = por %p70, %p71
    %p73 = scmp.ne.s32.totalorder %s61, %s62
    %p74 = scmp.eq.s32.totalorder %s19, 1
    %p75 = por %p73, %p74
    %p77 = scmp.ne.s32.totalorder %s62, %s76
    %p78 = scmp.eq.s32.totalorder %s19, 0
    %p79 = por %p77, %p78
    %s81 = sadd.s32 %s80, 1
    %p84 = scmp.eq.s32.totalorder %s13, 1
    %p85 = scmp.ne.s32.totalorder %s80, %s82
    %p86 = scmp.eq.s32.totalorder %s13, 0
    %p87 = por %p85, %p86
    %p88 = scmp.ne.s32.totalorder %s80, %s82
    %p89 = scmp.eq.s32.totalorder %s18, 1
    %p90 = por %p88, %p89
    %p91 = scmp.ne.s32.totalorder %s82, %s83
    %p92 = scmp.eq.s32.totalorder %s18, 0
    %p93 = por %p91, %p92
    %p94 = scmp.ne.s32.totalorder %s82, %s83
    %p95 = scmp.eq.s32.totalorder %s19, 1
    %p96 = por %p94, %p95
    %p98 = scmp.ne.s32.totalorder %s83, %s97
    %p99 = scmp.eq.s32.totalorder %s19, 0
    %p100 = por %p98, %p99
    %s102 = sadd.s32 %s101, 1
    %p105 = scmp.eq.s32.totalorder %s13, 1
    %p106 = scmp.ne.s32.totalorder %s101, %s103
    %p107 = scmp.eq.s32.totalorder %s13, 0
    %p108 = por %p106, %p107
    %p109 = scmp.ne.s32.totalorder %s101, %s103
    %p110 = scmp.eq.s32.totalorder %s18, 1
    %p111 = por %p109, %p110
    %p112 = scmp.ne.s32.totalorder %s103, %s104
    %p113 = scmp.eq.s32.totalorder %s18, 0
    %p114 = por %p112, %p113
    %p115 = scmp.ne.s32.totalorder %s103, %s104
    %p116 = scmp.eq.s32.totalorder %s19, 1
    %p117 = por %p115, %p116
    %p119 = scmp.ne.s32.totalorder %s104, %s118
    %p120 = scmp.eq.s32.totalorder %s19, 0
    %p121 = por %p119, %p120
    %s123 = sadd.s32 %s122, 1
    %p126 = scmp.eq.s32.totalorder %s13, 1
    %p127 = scmp.ne.s32.totalorder %s122, %s124
    %p128 = scmp.eq.s32.totalorder %s13, 0
    %p129 = por %p127, %p128
    %p130 = scmp.ne.s32.totalorder %s122, %s124
    %p131 = scmp.eq.s32.totalorder %s18, 1
    %p132 = por %p130, %p131
    %p133 = scmp.ne.s32.totalorder %s124, %s125
    %p134 = scmp.eq.s32.totalorder %s18, 0
    %p135 = por %p133, %p134
    %p136 = scmp.ne.s32.totalorder %s124, %s125
    %p137 = scmp.eq.s32.totalorder %s19, 1
    %p138 = por %p136, %p137
    %p140 = scmp.ne.s32.totalorder %s125, %s139
    %p141 = scmp.eq.s32.totalorder %s19, 0
    %p142 = por %p140, %p141
    %s143 = ssub.s32 %s21, %s28
    %p144 = scmp.eq.s32.totalorder %s143, 0
    %s146 = sadd.s32 %s145, 1
    %s147 = scalar_select %p144, %s145, %s146
    %p150 = pneg %p144
    %p151 = scmp.eq.s32.totalorder %s13, 1
    %p152 = por %p150, %p151
    %p153 = scmp.ne.s32.totalorder %s145, %s148
    %p154 = scmp.eq.s32.totalorder %s13, 0
    %p155 = por %p153, %p154
    %p156 = scmp.ne.s32.totalorder %s145, %s148
    %p157 = scmp.eq.s32.totalorder %s18, 1
    %p158 = por %p156, %p157
    %p159 = scmp.ne.s32.totalorder %s148, %s149
    %p160 = scmp.eq.s32.totalorder %s18, 0
    %p161 = por %p159, %p160
    %p162 = scmp.ne.s32.totalorder %s148, %s149
    %p163 = scmp.eq.s32.totalorder %s19, 1
    %p164 = por %p162, %p163
    %p166 = scmp.ne.s32.totalorder %s149, %s165
    %p167 = scmp.eq.s32.totalorder %s19, 0
    %p168 = por %p166, %p167
    %s169 = ssub.s32 %s21, %s28
    %p170 = scmp.eq.s32.totalorder %s169, 0
    %s172 = sadd.s32 %s171, 1
    %s173 = scalar_select %p170, %s171, %s172
    %p176 = pneg %p170
    %p177 = scmp.eq.s32.totalorder %s13, 1
    %p178 = por %p176, %p177
    %p179 = scmp.ne.s32.totalorder %s171, %s174
    %p180 = scmp.eq.s32.totalorder %s13, 0
    %p181 = por %p179, %p180
    %p182 = scmp.ne.s32.totalorder %s171, %s174
    %p183 = scmp.eq.s32.totalorder %s18, 1
    %p184 = por %p182, %p183
    %p185 = scmp.ne.s32.totalorder %s174, %s175
    %p186 = scmp.eq.s32.totalorder %s18, 0
    %p187 = por %p185, %p186
    %p188 = scmp.ne.s32.totalorder %s174, %s175
    %p189 = scmp.eq.s32.totalorder %s19, 1
    %p190 = por %p188, %p189
    %p192 = scmp.ne.s32.totalorder %s175, %s191
    %p193 = scmp.eq.s32.totalorder %s19, 0
    %p194 = por %p192, %p193
    %s195 = ssub.s32 %s20, %s32
    %s196 = ssub.s32 %s21, %s28
    %s197 = sor.u32 %s195, %s196
    %p198 = scmp.eq.s32.totalorder %s197, 0
    %s200 = sadd.s32 %s199, 1
    %s201 = scalar_select %p198, %s199, %s200
    %p204 = pneg %p198
    %p205 = scmp.eq.s32.totalorder %s13, 1
    %p206 = por %p204, %p205
    %p207 = scmp.ne.s32.totalorder %s199, %s202
    %p208 = scmp.eq.s32.totalorder %s13, 0
    %p209 = por %p207, %p208
    %p210 = scmp.ne.s32.totalorder %s199, %s202
    %p211 = scmp.eq.s32.totalorder %s18, 1
    %p212 = por %p210, %p211
    %p213 = scmp.ne.s32.totalorder %s202, %s203
    %p214 = scmp.eq.s32.totalorder %s18, 0
    %p215 = por %p213, %p214
    %p216 = scmp.ne.s32.totalorder %s202, %s203
    %p217 = scmp.eq.s32.totalorder %s19, 1
    %p218 = por %p216, %p217
    %p220 = scmp.ne.s32.totalorder %s203, %s219
    %p221 = scmp.eq.s32.totalorder %s19, 0
    %p222 = por %p220, %p221
    %p223 = scmp.le.s32.totalorder 1, %s13
    %p224 = scmp.lt.s32.totalorder %s13, 3
    %p225 = pnand %p223, %p224
    %p226 = pneg %p225
    // Predicated region
    $region9: #{kgprompt_forward.7} parent=5 // pred_check
      _
    $region10: #{kgprompt_forward.7} parent=5 // pred_check_branch
      %228 = sbr.rel (%p225) target = $region12
    $region11: #{kgprompt_forward.7} parent=5 // pred_region
      %s229 = ssub.s32 %s13, 1
      // Predicated region
      $region13: #{kgprompt_forward.7} parent=11 // pred_check
        %p230 = pneg %p72
      $region14: #{kgprompt_forward.7} parent=11 // pred_check_branch
        %232 = sbr.rel (%p230) target = $region16
      $region15: #{kgprompt_forward.7} parent=11 // pred_region
        _
      $region16: #{kgprompt_forward.7} parent=11 // pred_fallthru
        _
      // Predicated region
      $region17: #{kgprompt_forward.7} parent=11 // pred_check
        %p233 = pneg %p93
      $region18: #{kgprompt_forward.7} parent=11 // pred_check_branch
        %235 = sbr.rel (%p233) target = $region20
      $region19: #{kgprompt_forward.7} parent=11 // pred_region
        _
      $region20: #{kgprompt_forward.7} parent=11 // pred_fallthru
        _
      // Predicated region
      $region21: #{kgprompt_forward.7} parent=11 // pred_check
        %p236 = pneg %p114
      $region22: #{kgprompt_forward.7} parent=11 // pred_check_branch
        %238 = sbr.rel (%p236) target = $region24
      $region23: #{kgprompt_forward.7} parent=11 // pred_region
        _
      $region24: #{kgprompt_forward.7} parent=11 // pred_fallthru
        _
      // Predicated region
      $region25: #{kgprompt_forward.7} parent=11 // pred_check
        %p239 = pneg %p135
      $region26: #{kgprompt_forward.7} parent=11 // pred_check_branch
        %241 = sbr.rel (%p239) target = $region28
      $region27: #{kgprompt_forward.7} parent=11 // pred_region
        _
      $region28: #{kgprompt_forward.7} parent=11 // pred_fallthru
        _
      // Predicated region
      $region29: #{kgprompt_forward.7} parent=11 // pred_check
        %p242 = pneg %p161
      $region30: #{kgprompt_forward.7} parent=11 // pred_check_branch
        %244 = sbr.rel (%p242) target = $region32
      $region31: #{kgprompt_forward.7} parent=11 // pred_region
        %p245 = scmp.lt.s32.totalorder %s23, 0
        %s246 = scalar_select %p245, %s23, 0
        %s247 = smul.addr %s246, 4
        %s248 = scalar_lea.vmem %s5, %s247
      $region32: #{kgprompt_forward.7} parent=11 // pred_fallthru
        _
      // Predicated region
      $region33: #{kgprompt_forward.7} parent=11 // pred_check
        %p249 = pneg %p187
      $region34: #{kgprompt_forward.7} parent=11 // pred_check_branch
        %251 = sbr.rel (%p249) target = $region36
      $region35: #{kgprompt_forward.7} parent=11 // pred_region
        %p252 = scmp.lt.s32.totalorder %s23, 0
        %s253 = scalar_select %p252, %s23, 0
        %s254 = scalar_lea.vmem %s6, %s253
      $region36: #{kgprompt_forward.7} parent=11 // pred_fallthru
        _
    $region12: #{kgprompt_forward.7} parent=5 // pred_fallthru
      _
    %p255 = scmp.lt.s32.totalorder %s13, 2
    // Predicated region
    $region37: #{kgprompt_forward.7} parent=5 // pred_check
      %p256 = pneg %p255
    $region38: #{kgprompt_forward.7} parent=5 // pred_check_branch
      %258 = sbr.rel (%p256) target = $region40
    $region39: #{kgprompt_forward.7} parent=5 // pred_region
      // Predicated region
      $region41: #{kgprompt_forward.7} parent=39 // pred_check
        %p259 = pneg %p45
      $region42: #{kgprompt_forward.7} parent=39 // pred_check_branch
        %261 = sbr.rel (%p259) target = $region44
      $region43: #{kgprompt_forward.7} parent=39 // pred_region
        %p262 = scmp.lt.s32.totalorder %s20, 1
        %s263 = scalar_select %p262, %s20, 1
        %s264 = smul.addr %s263, 8
        %s265 = scalar_lea.vmem %s0, %s264
      $region44: #{kgprompt_forward.7} parent=39 // pred_fallthru
        _
    $region40: #{kgprompt_forward.7} parent=5 // pred_fallthru
      _
    %p266 = scmp.le.s32.totalorder 1, %s13
    %p267 = scmp.lt.s32.totalorder %s13, 3
    %p268 = pnand %p266, %p267
    %p269 = pneg %p268
    // Predicated region
    $region45: #{kgprompt_forward.7} parent=5 // pred_check
      _
    $region46: #{kgprompt_forward.7} parent=5 // pred_check_branch
      %271 = sbr.rel (%p268) target = $region48
    $region47: #{kgprompt_forward.7} parent=5 // pred_region
      %s272 = ssub.s32 %s13, 1
      %p273 = scmp.lt.s32.totalorder %s22, 1
      %s274 = scalar_select %p273, %s22, 1
      %s275 = smul.addr %s274, 8
      %s276 = scalar_lea.vmem %s0, %s275
      %p277 = pneg %p51
      %p278 = pneg %p48
      %p279 = pneg %p72
      %p280 = pneg %p69
      %p281 = pneg %p93
      %p282 = pneg %p90
      %p283 = pneg %p114
      %p284 = pneg %p111
      %p285 = pneg %p135
      %p286 = pneg %p132
      %p287 = scmp.lt.s32.totalorder %s23, 0
      %s288 = scalar_select %p287, %s23, 0
      %s289 = smul.addr %s288, 4
      %s290 = scalar_lea.vmem %s5, %s289
      %p291 = pneg %p161
      %p292 = pneg %p158
      %p293 = scmp.lt.s32.totalorder %s23, 0
      %s294 = scalar_select %p293, %s23, 0
      %s295 = scalar_lea.vmem %s6, %s294
      %p296 = pneg %p187
      %p297 = pneg %p184
      %p298 = pneg %p215
      %p299 = pneg %p212
      %p300 = scmp.lt.s32.totalorder %s22, 1
      %s301 = scalar_select %p300, %s22, 1
      %p302 = scmp.lt.s32.totalorder %s23, 0
      %s303 = scalar_select %p302, %s23, 0
      %s304 = sadd.s32 %s303, %s301
      %s305 = smul.addr %s304, 4
      %s306 = scalar_lea.vmem %s7, %s305
      %p307 = scmp.lt.s32.totalorder %s22, 1
      %s308 = scalar_select %p307, %s22, 1
      %s309 = smul.addr %s308, 8
      %s310 = scalar_lea.vmem %s0, %s309
      %p311 = scmp.lt.s32.totalorder %s23, 0
      %s312 = scalar_select %p311, %s23, 0
      %s313 = smul.addr %s312, 4
      %s314 = scalar_lea.vmem %s5, %s313
      %p315 = scmp.lt.s32.totalorder %s23, 0
      %s316 = scalar_select %p315, %s23, 0
      %s317 = scalar_lea.vmem %s6, %s316
      %p318 = scmp.lt.s32.totalorder %s22, 1
      %s319 = scalar_select %p318, %s22, 1
      %p320 = scmp.lt.s32.totalorder %s23, 0
      %s321 = scalar_select %p320, %s23, 0
      %s322 = sadd.s32 %s321, %s319
      %s323 = smul.addr %s322, 4
      %s324 = scalar_lea.vmem %s7, %s323
      %p326 = scmp.eq.s32.totalorder %s23, 0
      // Predicated region
      $region49: #{kgprompt_forward.7} parent=47 // pred_check
        %p327 = pneg %p326
      $region50: #{kgprompt_forward.7} parent=47 // pred_check_branch
        %329 = sbr.rel (%p327) target = $region52
      $region51: #{kgprompt_forward.7} parent=47 // pred_region
        %v330 = vld [vmem:[%s310] sm:$0xff]
        %v331 = vpack.c.bf16 %v330, %v330
        %v332 = vld [vmem:[%s1] sm:$0xf]
        %v333 = vld [vmem:[%s1 + $0x4] sm:$0xf]
        %v334 = vld [vmem:[%s1 + $0x8] sm:$0xf]
        %v335 = vld [vmem:[%s1 + $0xc] sm:$0xf]
        %v336 = vld [vmem:[%s2] sm:$0x1]
        %v338 = vlaneseq
        %v339 = vshrl.u32 %v338, 7
        %v340 = vsub.s32 0, %v339
        %v341 = vrot.slane %v336, %v340
        %v347 = vunpack.c.l.b16 %v332
        %v348 = vunpack.c.l.b16 %v333
        %v349 = vunpack.c.l.b16 %v334
        %v350 = vunpack.c.l.b16 %v335
        %v351 = vpack.c.b16 %v348, %v347
        %v352 = vpack.c.b16 %v350, %v349
        %vm355 = vcmask 261120
        %v357 = vsel %vm355, %v331, 0
        %359 = vmatprep.subr.bf16.mxu0 0
        %360 = vmatpush1.bf16.msra.mxu0 %v351
        %361 = vmatprep.subr.bf16.mxu0 0
        %362 = vmatpush1.bf16.msra.mxu0 %v352
        %363 = vmatprep.subr.bf16.mxu0 0
        %364 = vmatpush1.bf16.msra.mxu0 0
        %365 = vmatprep.subr.bf16.mxu0 0
        %366 = vmatpush1.bf16.msra.mxu0 0
        %367 = vmatprep.subr.bf16.mxu0 0
        %368 = vmatpush1.bf16.msra.mxu0 0
        %369 = vmatprep.subr.bf16.mxu0 0
        %370 = vmatpush1.bf16.msra.mxu0 0
        %371 = vmatprep.subr.bf16.mxu0 0
        %372 = vmatpush1.bf16.msra.mxu0 0
        %373 = vmatprep.subr.bf16.mxu0 0
        %374 = vmatpush1.bf16.msra.mxu0 0
        %375 = vmatprep.subr.bf16.mxu0 0
        %376 = vmatpush1.bf16.msra.mxu0 0
        %377 = vmatprep.subr.bf16.mxu0 0
        %378 = vmatpush1.bf16.msra.mxu0 0
        %379 = vmatprep.subr.bf16.mxu0 0
        %380 = vmatpush1.bf16.msra.mxu0 0
        %381 = vmatprep.subr.bf16.mxu0 0
        %382 = vmatpush1.bf16.msra.mxu0 0
        %383 = vmatprep.subr.bf16.mxu0 0
        %384 = vmatpush1.bf16.msra.mxu0 0
        %385 = vmatprep.subr.bf16.mxu0 0
        %386 = vmatpush1.bf16.msra.mxu0 0
        %387 = vmatprep.subr.bf16.mxu0 0
        %388 = vmatpush1.bf16.msra.mxu0 0
        %389 = vmatprep.subr.bf16.mxu0 0
        %390 = vmatpush1.bf16.msra.mxu0 0
        %391 = vmatprep.mubr.bf16.mxu0 0
        %392 = vmatmul.mubr.bf16.gmra.mrb[0].mxu0 %v357
        %v393 = vpop.f32.mrb[0].mxu0
        %v394 = vadd.f32 %v341, %v393
        %v395 = vpop.f32.mrb[0].mxu0
        %v396 = vpop.f32.mrb[0].mxu0
        %v397 = vpop.f32.mrb[0].mxu0
        %398 = vdwg.mxu0
        %v399 = vmax.f32 %v394, 0.0
        %v400 = vpack.c.bf16 %v399, %v399
        %v401 = vld [vmem:[%s3] sm:$0xf]
        %v402 = vld [vmem:[%s3 + $0x4] sm:$0xf]
        %v403 = vld [vmem:[%s4] sm:$0x1]
        %v405 = vlaneseq
        %v406 = vshrl.u32 %v405, 7
        %v407 = vsub.s32 0, %v406
        %v408 = vrot.slane %v403, %v407
        %v412 = vunpack.c.l.b16 %v401
        %v413 = vunpack.c.l.b16 %v402
        %v414 = vpack.c.b16 %v413, %v412
        %vm416 = vcmask 130048
        %v418 = vsel %vm416, %v400, 0
        %420 = vmatprep.subr.bf16.mxu0 0
        %421 = vmatpush1.bf16.msra.mxu0 %v414
        %422 = vmatprep.subr.bf16.mxu0 0
        %423 = vmatpush1.bf16.msra.mxu0 0
        %424 = vmatprep.subr.bf16.mxu0 0
        %425 = vmatpush1.bf16.msra.mxu0 0
        %426 = vmatprep.subr.bf16.mxu0 0
        %427 = vmatpush1.bf16.msra.mxu0 0
        %428 = vmatprep.subr.bf16.mxu0 0
        %429 = vmatpush1.bf16.msra.mxu0 0
        %430 = vmatprep.subr.bf16.mxu0 0
        %431 = vmatpush1.bf16.msra.mxu0 0
        %432 = vmatprep.subr.bf16.mxu0 0
        %433 = vmatpush1.bf16.msra.mxu0 0
        %434 = vmatprep.subr.bf16.mxu0 0
        %435 = vmatpush1.bf16.msra.mxu0 0
        %436 = vmatprep.subr.bf16.mxu0 0
        %437 = vmatpush1.bf16.msra.mxu0 0
        %438 = vmatprep.subr.bf16.mxu0 0
        %439 = vmatpush1.bf16.msra.mxu0 0
        %440 = vmatprep.subr.bf16.mxu0 0
        %441 = vmatpush1.bf16.msra.mxu0 0
        %442 = vmatprep.subr.bf16.mxu0 0
        %443 = vmatpush1.bf16.msra.mxu0 0
        %444 = vmatprep.subr.bf16.mxu0 0
        %445 = vmatpush1.bf16.msra.mxu0 0
        %446 = vmatprep.subr.bf16.mxu0 0
        %447 = vmatpush1.bf16.msra.mxu0 0
        %448 = vmatprep.subr.bf16.mxu0 0
        %449 = vmatpush1.bf16.msra.mxu0 0
        %450 = vmatprep.subr.bf16.mxu0 0
        %451 = vmatpush1.bf16.msra.mxu0 0
        %452 = vmatprep.mubr.bf16.mxu0 0
        %453 = vmatmul.mubr.bf16.gmra.mrb[0].mxu0 %v418
        %v454 = vpop.f32.mrb[0].mxu0
        %v455 = vadd.f32 %v408, %v454
        %v456 = vpop.f32.mrb[0].mxu0
        %v457 = vpop.f32.mrb[0].mxu0
        %v458 = vpop.f32.mrb[0].mxu0
        %459 = vdwg.mxu0
        %v460 = vadd.f32 %v455, %v330
        %v461 = vpack.c.bf16 %v460, %v460
        %vm462 = vcmask 257024
        %463 = vst.msk [vmem:[#allocation2] sm:$0xf] %vm462, %v461
      $region52: #{kgprompt_forward.7} parent=47 // pred_fallthru
        _
      %v464 = vld [vmem:[#allocation2] sm:$0xf]
      %v465 = vld [vmem:[%s314] sm:$0xf]
      %v466 = vld [vmem:[%s314 + $0x4] sm:$0xf]
      %v467 = vld [vmem:[%s314 + $0x8] sm:$0xf]
      %v468 = vld [vmem:[%s314 + $0xc] sm:$0xf]
      %v469 = vld [vmem:[%s317] sm:$0x1]
      %v471 = vlaneseq
      %v472 = vshrl.u32 %v471, 7
      %v473 = vsub.s32 0, %v472
      %v474 = vrot.slane %v469, %v473
      %v480 = vunpack.c.l.b16 %v465
      %v481 = vunpack.c.l.b16 %v466
      %v482 = vunpack.c.l.b16 %v467
      %v483 = vunpack.c.l.b16 %v468
      %v484 = vpack.c.b16 %v481, %v480
      %v485 = vpack.c.b16 %v483, %v482
      %vm488 = vcmask 261120
      %v490 = vsel %vm488, %v464, 0
      %492 = vmatprep.subr.bf16.mxu0 0
      %493 = vmatpush1.bf16.msra.mxu0 %v484
      %494 = vmatprep.subr.bf16.mxu0 0
      %495 = vmatpush1.bf16.msra.mxu0 %v485
      %496 = vmatprep.subr.bf16.mxu0 0
      %497 = vmatpush1.bf16.msra.mxu0 0
      %498 = vmatprep.subr.bf16.mxu0 0
      %499 = vmatpush1.bf16.msra.mxu0 0
      %500 = vmatprep.subr.bf16.mxu0 0
      %501 = vmatpush1.bf16.msra.mxu0 0
      %502 = vmatprep.subr.bf16.mxu0 0
      %503 = vmatpush1.bf16.msra.mxu0 0
      %504 = vmatprep.subr.bf16.mxu0 0
      %505 = vmatpush1.bf16.msra.mxu0 0
      %506 = vmatprep.subr.bf16.mxu0 0
      %507 = vmatpush1.bf16.msra.mxu0 0
      %508 = vmatprep.subr.bf16.mxu0 0
      %509 = vmatpush1.bf16.msra.mxu0 0
      %510 = vmatprep.subr.bf16.mxu0 0
      %511 = vmatpush1.bf16.msra.mxu0 0
      %512 = vmatprep.subr.bf16.mxu0 0
      %513 = vmatpush1.bf16.msra.mxu0 0
      %514 = vmatprep.subr.bf16.mxu0 0
      %515 = vmatpush1.bf16.msra.mxu0 0
      %516 = vmatprep.subr.bf16.mxu0 0
      %517 = vmatpush1.bf16.msra.mxu0 0
      %518 = vmatprep.subr.bf16.mxu0 0
      %519 = vmatpush1.bf16.msra.mxu0 0
      %520 = vmatprep.subr.bf16.mxu0 0
      %521 = vmatpush1.bf16.msra.mxu0 0
      %522 = vmatprep.subr.bf16.mxu0 0
      %523 = vmatpush1.bf16.msra.mxu0 0
      %524 = vmatprep.mubr.bf16.mxu0 0
      %525 = vmatmul.mubr.bf16.gmra.mrb[0].mxu0 %v490
      %v526 = vpop.f32.mrb[0].mxu0
      %v527 = vadd.f32 %v474, %v526
      %v528 = vpop.f32.mrb[0].mxu0
      %v529 = vpop.f32.mrb[0].mxu0
      %v530 = vpop.f32.mrb[0].mxu0
      %531 = vdwg.mxu0
      %v532 = vpack.c.bf16 %v527, %v527
      %533 = vst [vmem:[%s324] sm:$0xf] %v532
      %p534 = scmp.lt.s32.totalorder %s22, 1
      %s535 = scalar_select %p534, %s22, 1
      %p536 = scmp.lt.s32.totalorder %s23, 0
      %s537 = scalar_select %p536, %s23, 0
      %s538 = sadd.s32 %s537, %s535
      %s539 = smul.addr %s538, 4
      %s540 = scalar_lea.vmem %s7, %s539
      // Predicated region
      $region53: #{kgprompt_forward.7} parent=47 // pred_check
        %p541 = pneg %p212
      $region54: #{kgprompt_forward.7} parent=47 // pred_check_branch
        %543 = sbr.rel (%p541) target = $region56
      $region55: #{kgprompt_forward.7} parent=47 // pred_region
        _
      $region56: #{kgprompt_forward.7} parent=47 // pred_fallthru
        _
    $region48: #{kgprompt_forward.7} parent=5 // pred_fallthru
      _
    %p544 = scmp.le.s32.totalorder 2, %s13
    // Predicated region
    $region57: #{kgprompt_forward.7} parent=5 // pred_check
      %p545 = pneg %p544
    $region58: #{kgprompt_forward.7} parent=5 // pred_check_branch
      %547 = sbr.rel (%p545) target = $region60
    $region59: #{kgprompt_forward.7} parent=5 // pred_region
      %s548 = ssub.s32 %s13, 2
      // Predicated region
      $region61: #{kgprompt_forward.7} parent=59 // pred_check
        %p549 = pneg %p218
      $region62: #{kgprompt_forward.7} parent=59 // pred_check_branch
        %551 = sbr.rel (%p549) target = $region64
      $region63: #{kgprompt_forward.7} parent=59 // pred_region
        %p552 = scmp.lt.s32.totalorder %s24, 1
        %s553 = scalar_select %p552, %s24, 1
        %p554 = scmp.lt.s32.totalorder %s25, 0
        %s555 = scalar_select %p554, %s25, 0
        %s556 = sadd.s32 %s555, %s553
        %s557 = smul.addr %s556, 4
        %s558 = scalar_lea.vmem %s7, %s557
      $region64: #{kgprompt_forward.7} parent=59 // pred_fallthru
        _
    $region60: #{kgprompt_forward.7} parent=5 // pred_fallthru
      _
  $region6: #{kgprompt_forward.7} parent=0 // loop_footer
    %s17 = sadd.s32 1, %s13
  $region7: #{kgprompt_forward.7} parent=0 // loop_footer_branch
    %12 = sbr.rel target = $region3
  $region8: #{kgprompt_forward.7} parent=0 // loop_exit
    _

// kernel: kgprompt_forward.6
$region0: #{kgprompt_forward.6}
  #allocation0 [shape = 'u32[]', space=smem, size = 0x4, offset = 0x4, fixed_abs, tag = 'smem constant byte address 0x4 - core index']
  #allocation1 [shape = 'u32[144,128]{1,0:T(1,128)}', space=vmem, size = 0x12000, scoped, tag = 'internal scratch']
  %s0 = inlined_call_operand.vmem [shape: f32[2,8,32], index: 0, kind: input, shape index: {}]
  %s1 = inlined_call_operand.vmem [shape: bf16[2,8,32], index: 1, kind: input, shape index: {}]
  %s2 = inlined_call_operand.vmem [shape: bf16[2,128,32], index: 2, kind: input, shape index: {}]
  %s3 = inlined_call_operand.vmem [shape: f32[2,8,32], index: 3, kind: output, shape index: {}]
  %s4 = sld [smem:[#allocation0]]
  $region45: #{kgprompt_forward.6} parent=0
    _
  %s6 = ssub.s32 1, %s4
  %s7 = scalar_select 0, %s6, %s4
  loop: start=0, step=1, limit=4
  $region2: #{kgprompt_forward.6} parent=0 // loop_pre_header
    _
  $region3: #{kgprompt_forward.6} parent=0 // loop_header
    %s9 = sphi 0, %s13
    %p10 = scmp.ge.s32.totalorder %s9, 4
    %s19 = sphi 0, %s21
    %s22 = sphi 0, %s19
    %s23 = sphi 0, %s22
    %s39 = sphi 0, %s23
    %s45 = sphi 0, %s47
    %s48 = sphi 0, %s45
    %s49 = sphi 0, %s48
    %s65 = sphi 0, %s49
    %s71 = sphi 0, %s73
    %s74 = sphi 0, %s71
    %s75 = sphi 0, %s74
    %s91 = sphi 0, %s75
    %s97 = sphi 0, %s99
    %s100 = sphi 0, %s97
    %s101 = sphi 0, %s100
    %s117 = sphi 0, %s101
  $region4: #{kgprompt_forward.6} parent=0 // loop_header_branch
    %12 = sbr.rel (%p10) target = $region8
  $region5: #{kgprompt_forward.6} parent=0 // loop_body
    %s14 = ssub.s32 %s9, 1
    %s15 = ssub.s32 %s9, 2
    %s16 = sadd.s32 %s9, 1
    %s17 = ssub.s32 %s9, %s16
    %p18 = scmp.eq.s32.totalorder %s17, 0
    %s20 = sadd.s32 %s19, 1
    %s21 = scalar_select %p18, %s19, %s20
    %p24 = pneg %p18
    %p25 = scmp.eq.s32.totalorder %s9, 1
    %p26 = por %p24, %p25
    %p27 = scmp.ne.s32.totalorder %s19, %s22
    %p28 = scmp.eq.s32.totalorder %s9, 0
    %p29 = por %p27, %p28
    %p30 = scmp.ne.s32.totalorder %s19, %s22
    %p31 = scmp.eq.s32.totalorder %s14, 1
    %p32 = por %p30, %p31
    %p33 = scmp.ne.s32.totalorder %s22, %s23
    %p34 = scmp.eq.s32.totalorder %s14, 0
    %p35 = por %p33, %p34
    %p36 = scmp.ne.s32.totalorder %s22, %s23
    %p37 = scmp.eq.s32.totalorder %s15, 1
    %p38 = por %p36, %p37
    %p40 = scmp.ne.s32.totalorder %s23, %s39
    %p41 = scmp.eq.s32.totalorder %s15, 0
    %p42 = por %p40, %p41
    %s43 = ssub.s32 %s9, %s16
    %p44 = scmp.eq.s32.totalorder %s43, 0
    %s46 = sadd.s32 %s45, 1
    %s47 = scalar_select %p44, %s45, %s46
    %p50 = pneg %p44
    %p51 = scmp.eq.s32.totalorder %s9, 1
    %p52 = por %p50, %p51
    %p53 = scmp.ne.s32.totalorder %s45, %s48
    %p54 = scmp.eq.s32.totalorder %s9, 0
    %p55 = por %p53, %p54
    %p56 = scmp.ne.s32.totalorder %s45, %s48
    %p57 = scmp.eq.s32.totalorder %s14, 1
    %p58 = por %p56, %p57
    %p59 = scmp.ne.s32.totalorder %s48, %s49
    %p60 = scmp.eq.s32.totalorder %s14, 0
    %p61 = por %p59, %p60
    %p62 = scmp.ne.s32.totalorder %s48, %s49
    %p63 = scmp.eq.s32.totalorder %s15, 1
    %p64 = por %p62, %p63
    %p66 = scmp.ne.s32.totalorder %s49, %s65
    %p67 = scmp.eq.s32.totalorder %s15, 0
    %p68 = por %p66, %p67
    %s69 = ssub.s32 %s9, %s16
    %p70 = scmp.eq.s32.totalorder %s69, 0
    %s72 = sadd.s32 %s71, 1
    %s73 = scalar_select %p70, %s71, %s72
    %p76 = pneg %p70
    %p77 = scmp.eq.s32.totalorder %s9, 1
    %p78 = por %p76, %p77
    %p79 = scmp.ne.s32.totalorder %s71, %s74
    %p80 = scmp.eq.s32.totalorder %s9, 0
    %p81 = por %p79, %p80
    %p82 = scmp.ne.s32.totalorder %s71, %s74
    %p83 = scmp.eq.s32.totalorder %s14, 1
    %p84 = por %p82, %p83
    %p85 = scmp.ne.s32.totalorder %s74, %s75
    %p86 = scmp.eq.s32.totalorder %s14, 0
    %p87 = por %p85, %p86
    %p88 = scmp.ne.s32.totalorder %s74, %s75
    %p89 = scmp.eq.s32.totalorder %s15, 1
    %p90 = por %p88, %p89
    %p92 = scmp.ne.s32.totalorder %s75, %s91
    %p93 = scmp.eq.s32.totalorder %s15, 0
    %p94 = por %p92, %p93
    %s95 = ssub.s32 %s9, %s16
    %p96 = scmp.eq.s32.totalorder %s95, 0
    %s98 = sadd.s32 %s97, 1
    %s99 = scalar_select %p96, %s97, %s98
    %p102 = pneg %p96
    %p103 = scmp.eq.s32.totalorder %s9, 1
    %p104 = por %p102, %p103
    %p105 = scmp.ne.s32.totalorder %s97, %s100
    %p106 = scmp.eq.s32.totalorder %s9, 0
    %p107 = por %p105, %p106
    %p108 = scmp.ne.s32.totalorder %s97, %s100
    %p109 = scmp.eq.s32.totalorder %s14, 1
    %p110 = por %p108, %p109
    %p111 = scmp.ne.s32.totalorder %s100, %s101
    %p112 = scmp.eq.s32.totalorder %s14, 0
    %p113 = por %p111, %p112
    %p114 = scmp.ne.s32.totalorder %s100, %s101
    %p115 = scmp.eq.s32.totalorder %s15, 1
    %p116 = por %p114, %p115
    %p118 = scmp.ne.s32.totalorder %s101, %s117
    %p119 = scmp.eq.s32.totalorder %s15, 0
    %p120 = por %p118, %p119
    %p121 = scmp.le.s32.totalorder 1, %s9
    %p122 = scmp.lt.s32.totalorder %s9, 3
    %p123 = pnand %p121, %p122
    %p124 = pneg %p123
    // Predicated region
    $region9: #{kgprompt_forward.6} parent=5 // pred_check
      _
    $region10: #{kgprompt_forward.6} parent=5 // pred_check_branch
      %126 = sbr.rel (%p123) target = $region12
    $region11: #{kgprompt_forward.6} parent=5 // pred_region
      %s127 = ssub.s32 %s9, 1
    $region12: #{kgprompt_forward.6} parent=5 // pred_fallthru
      _
    %p128 = scmp.lt.s32.totalorder %s9, 2
    // Predicated region
    $region13: #{kgprompt_forward.6} parent=5 // pred_check
      %p129 = pneg %p128
    $region14: #{kgprompt_forward.6} parent=5 // pred_check_branch
      %131 = sbr.rel (%p129) target = $region16
    $region15: #{kgprompt_forward.6} parent=5 // pred_region
      // Predicated region
      $region17: #{kgprompt_forward.6} parent=15 // pred_check
        %p132 = pneg %p29
      $region18: #{kgprompt_forward.6} parent=15 // pred_check_branch
        %134 = sbr.rel (%p132) target = $region20
      $region19: #{kgprompt_forward.6} parent=15 // pred_region
        %p135 = scmp.lt.s32.totalorder %s9, 1
        %s136 = scalar_select %p135, %s9, 1
        %s137 = smul.addr %s136, 8
        %s138 = scalar_lea.vmem %s0, %s137
      $region20: #{kgprompt_forward.6} parent=15 // pred_fallthru
        _
      // Predicated region
      $region21: #{kgprompt_forward.6} parent=15 // pred_check
        %p139 = pneg %p55
      $region22: #{kgprompt_forward.6} parent=15 // pred_check_branch
        %141 = sbr.rel (%p139) target = $region24
      $region23: #{kgprompt_forward.6} parent=15 // pred_region
        %p142 = scmp.lt.s32.totalorder %s9, 1
        %s143 = scalar_select %p142, %s9, 1
        %s144 = smul.addr %s143, 4
        %s145 = scalar_lea.vmem %s1, %s144
      $region24: #{kgprompt_forward.6} parent=15 // pred_fallthru
        _
      // Predicated region
      $region25: #{kgprompt_forward.6} parent=15 // pred_check
        %p146 = pneg %p81
      $region26: #{kgprompt_forward.6} parent=15 // pred_check_branch
        %148 = sbr.rel (%p146) target = $region28
      $region27: #{kgprompt_forward.6} parent=15 // pred_region
        %p149 = scmp.lt.s32.totalorder %s9, 1
        %s150 = scalar_select %p149, %s9, 1
        %s151 = smul.addr %s150, 16
        %s152 = smul.addr %s151, 4
        %s153 = scalar_lea.vmem %s2, %s152
      $region28: #{kgprompt_forward.6} parent=15 // pred_fallthru
        _
    $region16: #{kgprompt_forward.6} parent=5 // pred_fallthru
      _
    %p154 = scmp.le.s32.totalorder 1, %s9
    %p155 = scmp.lt.s32.totalorder %s9, 3
    %p156 = pnand %p154, %p155
    %p157 = pneg %p156
    // Predicated region
    $region29: #{kgprompt_forward.6} parent=5 // pred_check
      _
    $region30: #{kgprompt_forward.6} parent=5 // pred_check_branch
      %159 = sbr.rel (%p156) target = $region32
    $region31: #{kgprompt_forward.6} parent=5 // pred_region
      %s160 = ssub.s32 %s9, 1
      %p161 = scmp.lt.s32.totalorder %s14, 1
      %s162 = scalar_select %p161, %s14, 1
      %s163 = smul.addr %s162, 8
      %s164 = scalar_lea.vmem %s0, %s163
      %p165 = pneg %p35
      %p166 = pneg %p32
      %p167 = scmp.lt.s32.totalorder %s14, 1
      %s168 = scalar_select %p167, %s14, 1
      %s169 = smul.addr %s168, 4
      %s170 = scalar_lea.vmem %s1, %s169
      %p171 = pneg %p61
      %p172 = pneg %p58
      %p173 = scmp.lt.s32.totalorder %s14, 1
      %s174 = scalar_select %p173, %s14, 1
      %s175 = smul.addr %s174, 16
      %s176 = smul.addr %s175, 4
      %s177 = scalar_lea.vmem %s2, %s176
      %p178 = pneg %p87
      %p179 = pneg %p84
      %p180 = pneg %p113
      %p181 = pneg %p110
      %p182 = scmp.lt.s32.totalorder %s14, 1
      %s183 = scalar_select %p182, %s14, 1
      %s184 = smul.addr %s183, 8
      %s185 = scalar_lea.vmem %s3, %s184
      %p186 = scmp.lt.s32.totalorder %s14, 1
      %s187 = scalar_select %p186, %s14, 1
      %s188 = smul.addr %s187, 8
      %s189 = scalar_lea.vmem %s0, %s188
      %p190 = scmp.lt.s32.totalorder %s14, 1
      %s191 = scalar_select %p190, %s14, 1
      %s192 = smul.addr %s191, 4
      %s193 = scalar_lea.vmem %s1, %s192
      %p194 = scmp.lt.s32.totalorder %s14, 1
      %s195 = scalar_select %p194, %s14, 1
      %s196 = smul.addr %s195, 16
      %s197 = smul.addr %s196, 4
      %s198 = scalar_lea.vmem %s2, %s197
      %p199 = scmp.lt.s32.totalorder %s14, 1
      %s200 = scalar_select %p199, %s14, 1
      %s201 = smul.addr %s200, 8
      %s202 = scalar_lea.vmem %s3, %s201
      %v204 = vld [vmem:[%s189] sm:$0xff]
      %v205 = vld [vmem:[%s193] sm:$0xf]
      %v206 = vld [vmem:[%s198] sm:$0xf]
      %v207 = vld [vmem:[%s198 + $0x4] sm:$0xf]
      %v208 = vld [vmem:[%s198 + $0x8] sm:$0xf]
      %v209 = vld [vmem:[%s198 + $0xc] sm:$0xf]
      %v210 = vld [vmem:[%s198 + $0x10] sm:$0xf]
      %v211 = vld [vmem:[%s198 + $0x14] sm:$0xf]
      %v212 = vld [vmem:[%s198 + $0x18] sm:$0xf]
      %v213 = vld [vmem:[%s198 + $0x1c] sm:$0xf]
      %v214 = vld [vmem:[%s198 + $0x20] sm:$0xf]
      %v215 = vld [vmem:[%s198 + $0x24] sm:$0xf]
      %v216 = vld [vmem:[%s198 + $0x28] sm:$0xf]
      %v217 = vld [vmem:[%s198 + $0x2c] sm:$0xf]
      %v218 = vld [vmem:[%s198 + $0x30] sm:$0xf]
      %v219 = vld [vmem:[%s198 + $0x34] sm:$0xf]
      %v220 = vld [vmem:[%s198 + $0x38] sm:$0xf]
      %v221 = vld [vmem:[%s198 + $0x3c] sm:$0xf]
      %v238 = vunpack.c.l.b16 %v206
      %v239 = vunpack.c.l.b16 %v207
      %v240 = vunpack.c.l.b16 %v208
      %v241 = vunpack.c.l.b16 %v209
      %v242 = vunpack.c.l.b16 %v210
      %v243 = vunpack.c.l.b16 %v211
      %v244 = vunpack.c.l.b16 %v212
      %v245 = vunpack.c.l.b16 %v213
      %v246 = vunpack.c.l.b16 %v214
      %v247 = vunpack.c.l.b16 %v215
      %v248 = vunpack.c.l.b16 %v216
      %v249 = vunpack.c.l.b16 %v217
      %v250 = vunpack.c.l.b16 %v218
      %v251 = vunpack.c.l.b16 %v219
      %v252 = vunpack.c.l.b16 %v220
      %v253 = vunpack.c.l.b16 %v221
      %v254 = vpack.c.b16 %v239, %v238
      %v255 = vpack.c.b16 %v241, %v240
      %v256 = vpack.c.b16 %v243, %v242
      %v257 = vpack.c.b16 %v245, %v244
      %v258 = vpack.c.b16 %v247, %v246
      %v259 = vpack.c.b16 %v249, %v248
      %v260 = vpack.c.b16 %v251, %v250
      %v261 = vpack.c.b16 %v253, %v252
      %vm262 = vcmask 261120
      %v264 = vsel %vm262, %v205, 0
      %v267 = vsel %vm262, %v254, 0
      %v270 = vsel %vm262, %v255, 0
      %v273 = vsel %vm262, %v256, 0
      %v276 = vsel %vm262, %v257, 0
      %v279 = vsel %vm262, %v258, 0
      %v282 = vsel %vm262, %v259, 0
      %v285 = vsel %vm262, %v260, 0
      %v288 = vsel %vm262, %v261, 0
      %290 = vmatprep.subr.bf16.mxu0 0
      %291 = vmatpush1.bf16.xpose.msra.mxu0 %v267
      %292 = vmatprep.subr.bf16.mxu0 0
      %293 = vmatpush1.bf16.xpose.msra.mxu0 %v270
      %294 = vmatprep.subr.bf16.mxu0 0
      %295 = vmatpush1.bf16.xpose.msra.mxu0 %v273
      %296 = vmatprep.subr.bf16.mxu0 0
      %297 = vmatpush1.bf16.xpose.msra.mxu0 %v276
      %298 = vmatprep.subr.bf16.mxu0 0
      %299 = vmatpush1.bf16.xpose.msra.mxu0 %v279
      %300 = vmatprep.subr.bf16.mxu0 0
      %301 = vmatpush1.bf16.xpose.msra.mxu0 %v282
      %302 = vmatprep.subr.bf16.mxu0 0
      %303 = vmatpush1.bf16.xpose.msra.mxu0 %v285
      %304 = vmatprep.subr.bf16.mxu0 0
      %305 = vmatpush1.bf16.xpose.msra.mxu0 %v288
      %306 = vmatprep.subr.bf16.mxu0 0
      %307 = vmatpush1.bf16.xpose.msra.mxu0 0
      %308 = vmatprep.subr.bf16.mxu0 0
      %309 = vmatpush1.bf16.xpose.msra.mxu0 0
      %310 = vmatprep.subr.bf16.mxu0 0
      %311 = vmatpush1.bf16.xpose.msra.mxu0 0
      %312 = vmatprep.subr.bf16.mxu0 0
      %313 = vmatpush1.bf16.xpose.msra.mxu0 0
      %314 = vmatprep.subr.bf16.mxu0 0
      %315 = vmatpush1.bf16.xpose.msra.mxu0 0
      %316 = vmatprep.subr.bf16.mxu0 0
      %317 = vmatpush1.bf16.xpose.msra.mxu0 0
      %318 = vmatprep.subr.bf16.mxu0 0
      %319 = vmatpush1.bf16.xpose.msra.mxu0 0
      %320 = vmatprep.subr.bf16.mxu0 0
      %321 = vmatpush1.bf16.xpose.msra.mxu0 0
      %322 = vmatprep.mubr.bf16.mxu0 0
      %323 = vmatmul.mubr.bf16.gmra.mrb[0].mxu0 %v264
      %v324 = vpop.f32.mrb[0].mxu0
      %v325 = vadd.f32 0.0, %v324
      %v326 = vpop.f32.mrb[0].mxu0
      %v327 = vpop.f32.mrb[0].mxu0
      %v328 = vpop.f32.mrb[0].mxu0
      %329 = vdwg.mxu0
      %v330 = vlaneseq
      %v331 = vand.u32 %v330, 127
      %vm332 = vcmp.lt.s32.totalorder %v331, 4
      %v333 = vsel %vm332, %v325, -1e+30
      %334 = vmax.xlane.f32.xlu0 %v333
      %v335 = vpop.xlane.xlu0 %334
      %v336 = vsub.f32 %v333, %v335
      %v337 = vmul.f32 %v336, 1.442695
      %v338 = vpow.pop %v337
      %339 = vadd.xlane.f32.xlu0 %v338
      %v340 = vpop.xlane.xlu0 %339
      %v341 = vrcp.pop %v340
      %v342 = vmul.f32 %v338, %v341
      %v343 = vpack.c.bf16 %v342, %v342
      %352 = vmatprep.subr.bf16.mxu0 0
      %353 = vmatpush1.bf16.msra.mxu0 %v254
      %354 = vmatprep.subr.bf16.mxu0 0
      %355 = vmatpush1.bf16.msra.mxu0 %v255
      %356 = vmatprep.subr.bf16.mxu0 0
      %357 = vmatpush1.bf16.msra.mxu0 %v256
      %358 = vmatprep.subr.bf16.mxu0 0
      %359 = vmatpush1.bf16.msra.mxu0 %v257
      %360 = vmatprep.subr.bf16.mxu0 0
      %361 = vmatpush1.bf16.msra.mxu0 %v258
      %362 = vmatprep.subr.bf16.mxu0 0
      %363 = vmatpush1.bf16.msra.mxu0 %v259
      %364 = vmatprep.subr.bf16.mxu0 0
      %365 = vmatpush1.bf16.msra.mxu0 %v260
      %366 = vmatprep.subr.bf16.mxu0 0
      %367 = vmatpush1.bf16.msra.mxu0 %v261
      %368 = vmatprep.subr.bf16.mxu0 0
      %369 = vmatpush1.bf16.msra.mxu0 0
      %370 = vmatprep.subr.bf16.mxu0 0
      %371 = vmatpush1.bf16.msra.mxu0 0
      %372 = vmatprep.subr.bf16.mxu0 0
      %373 = vmatpush1.bf16.msra.mxu0 0
      %374 = vmatprep.subr.bf16.mxu0 0
      %375 = vmatpush1.bf16.msra.mxu0 0
      %376 = vmatprep.subr.bf16.mxu0 0
      %377 = vmatpush1.bf16.msra.mxu0 0
      %378 = vmatprep.subr.bf16.mxu0 0
      %379 = vmatpush1.bf16.msra.mxu0 0
      %380 = vmatprep.subr.bf16.mxu0 0
      %381 = vmatpush1.bf16.msra.mxu0 0
      %382 = vmatprep.subr.bf16.mxu0 0
      %383 = vmatpush1.bf16.msra.mxu0 0
      %384 = vmatprep.mubr.bf16.mxu0 0
      %385 = vmatmul.mubr.bf16.gmra.mrb[0].mxu0 %v343
      %v386 = vpop.f32.mrb[0].mxu0
      %v387 = vadd.f32 %v204, %v386
      %v388 = vpop.f32.mrb[0].mxu0
      %v389 = vpop.f32.mrb[0].mxu0
      %v390 = vpop.f32.mrb[0].mxu0
      %391 = vdwg.mxu0
      %392 = vst.msk [vmem:[%s202] sm:$0xff] %vm262, %v387
      %p393 = scmp.lt.s32.totalorder %s14, 1
      %s394 = scalar_select %p393, %s14, 1
      %s395 = smul.addr %s394, 8
      %s396 = scalar_lea.vmem %s3, %s395
      // Predicated region
      $region33: #{kgprompt_forward.6} parent=31 // pred_check
        %p397 = pneg %p110
      $region34: #{kgprompt_forward.6} parent=31 // pred_check_branch
        %399 = sbr.rel (%p397) target = $region36
      $region35: #{kgprompt_forward.6} parent=31 // pred_region
        _
      $region36: #{kgprompt_forward.6} parent=31 // pred_fallthru
        _
    $region32: #{kgprompt_forward.6} parent=5 // pred_fallthru
      _
    %p400 = scmp.le.s32.totalorder 2, %s9
    // Predicated region
    $region37: #{kgprompt_forward.6} parent=5 // pred_check
      %p401 = pneg %p400
    $region38: #{kgprompt_forward.6} parent=5 // pred_check_branch
      %403 = sbr.rel (%p401) target = $region40
    $region39: #{kgprompt_forward.6} parent=5 // pred_region
      %s404 = ssub.s32 %s9, 2
      // Predicated region
      $region41: #{kgprompt_forward.6} parent=39 // pred_check
        %p405 = pneg %p116
      $region42: #{kgprompt_forward.6} parent=39 // pred_check_branch
        %407 = sbr.rel (%p405) target = $region44
      $region43: #{kgprompt_forward.6} parent=39 // pred_region
        %p408 = scmp.lt.s32.totalorder %s15, 1
        %s409 = scalar_select %p408, %s15, 1
        %s410 = smul.addr %s409, 8
        %s411 = scalar_lea.vmem %s3, %s410
      $region44: #{kgprompt_forward.6} parent=39 // pred_fallthru
        _
    $region40: #{kgprompt_forward.6} parent=5 // pred_fallthru
      _
  $region6: #{kgprompt_forward.6} parent=0 // loop_footer
    %s13 = sadd.s32 1, %s9
  $region7: #{kgprompt_forward.6} parent=0 // loop_footer_branch
    %8 = sbr.rel target = $region3
  $region8: #{kgprompt_forward.6} parent=0 // loop_exit
    _

// kernel: kgprompt_forward.4
$region0: #{kgprompt_forward.4}
  #allocation0 [shape = 'u32[]', space=smem, size = 0x4, offset = 0x4, fixed_abs, tag = 'smem constant byte address 0x4 - core index']
  #allocation1 [shape = 'u32[144,128]{1,0:T(1,128)}', space=vmem, size = 0x12000, scoped, tag = 'internal scratch']
  #allocation2 [shape = 'bf16[8,16]{1,0:T(8,128)(2,1)}', space=vmem, size = 0x800, scoped, tag = 'scratch operand']
  %s0 = inlined_call_operand.vmem [shape: f32[8,16], index: 0, kind: input, shape index: {}]
  %s1 = inlined_call_operand.vmem [shape: bf16[16,8], index: 1, kind: input, shape index: {}]
  %s2 = inlined_call_operand.vmem [shape: f32[1,8], index: 2, kind: input, shape index: {}]
  %s3 = inlined_call_operand.vmem [shape: bf16[8,16], index: 3, kind: input, shape index: {}]
  %s4 = inlined_call_operand.vmem [shape: f32[1,16], index: 4, kind: input, shape index: {}]
  %s5 = inlined_call_operand.vmem [shape: bf16[16,32], index: 5, kind: input, shape index: {}]
  %s6 = inlined_call_operand.vmem [shape: f32[1,32], index: 6, kind: input, shape index: {}]
  %s7 = inlined_call_operand.vmem [shape: f32[8,32], index: 7, kind: output, shape index: {}]
  %s8 = sld [smem:[#allocation0]]
  $region42: #{kgprompt_forward.4} parent=0
    _
  %s10 = ssub.s32 1, %s8
  %s11 = scalar_select 0, %s10, %s8
  // Predicated region
  $region2: #{kgprompt_forward.4} parent=0 // pred_check
    _
  $region3: #{kgprompt_forward.4} parent=0 // pred_check_branch
    %13 = sbr.rel (0) target = $region5
  $region4: #{kgprompt_forward.4} parent=0 // pred_region
    _
  $region5: #{kgprompt_forward.4} parent=0 // pred_fallthru
    _
  // Predicated region
  $region6: #{kgprompt_forward.4} parent=0 // pred_check
    _
  $region7: #{kgprompt_forward.4} parent=0 // pred_check_branch
    %15 = sbr.rel (0) target = $region9
  $region8: #{kgprompt_forward.4} parent=0 // pred_region
    _
  $region9: #{kgprompt_forward.4} parent=0 // pred_fallthru
    _
  // Predicated region
  $region10: #{kgprompt_forward.4} parent=0 // pred_check
    _
  $region11: #{kgprompt_forward.4} parent=0 // pred_check_branch
    %17 = sbr.rel (0) target = $region13
  $region12: #{kgprompt_forward.4} parent=0 // pred_region
    _
  $region13: #{kgprompt_forward.4} parent=0 // pred_fallthru
    _
  // Predicated region
  $region14: #{kgprompt_forward.4} parent=0 // pred_check
    _
  $region15: #{kgprompt_forward.4} parent=0 // pred_check_branch
    %19 = sbr.rel (0) target = $region17
  $region16: #{kgprompt_forward.4} parent=0 // pred_region
    _
  $region17: #{kgprompt_forward.4} parent=0 // pred_fallthru
    _
  // Predicated region
  $region18: #{kgprompt_forward.4} parent=0 // pred_check
    _
  $region19: #{kgprompt_forward.4} parent=0 // pred_check_branch
    %21 = sbr.rel (0) target = $region21
  $region20: #{kgprompt_forward.4} parent=0 // pred_region
    _
  $region21: #{kgprompt_forward.4} parent=0 // pred_fallthru
    _
  // Predicated region
  $region22: #{kgprompt_forward.4} parent=0 // pred_check
    _
  $region23: #{kgprompt_forward.4} parent=0 // pred_check_branch
    %23 = sbr.rel (0) target = $region25
  $region24: #{kgprompt_forward.4} parent=0 // pred_region
    _
  $region25: #{kgprompt_forward.4} parent=0 // pred_fallthru
    _
  // Predicated region
  $region26: #{kgprompt_forward.4} parent=0 // pred_check
    _
  $region27: #{kgprompt_forward.4} parent=0 // pred_check_branch
    %25 = sbr.rel (0) target = $region29
  $region28: #{kgprompt_forward.4} parent=0 // pred_region
    _
  $region29: #{kgprompt_forward.4} parent=0 // pred_fallthru
    _
  %p27 = scmp.eq.s32.totalorder 0, 0
  // Predicated region
  $region30: #{kgprompt_forward.4} parent=0 // pred_check
    %p28 = pneg %p27
  $region31: #{kgprompt_forward.4} parent=0 // pred_check_branch
    %30 = sbr.rel (%p28) target = $region33
  $region32: #{kgprompt_forward.4} parent=0 // pred_region
    %v31 = vld [vmem:[%s0] sm:$0xff]
    %v32 = vpack.c.bf16 %v31, %v31
    %v33 = vld [vmem:[%s1] sm:$0xf]
    %v34 = vld [vmem:[%s1 + $0x4] sm:$0xf]
    %v35 = vld [vmem:[%s2] sm:$0x1]
    %v37 = vlaneseq
    %v38 = vshrl.u32 %v37, 7
    %v39 = vsub.s32 0, %v38
    %v40 = vrot.slane %v35, %v39
    %v44 = vunpack.c.l.b16 %v33
    %v45 = vunpack.c.l.b16 %v34
    %v46 = vpack.c.b16 %v45, %v44
    %vm48 = vcmask 130048
    %v50 = vsel %vm48, %v32, 0
    %52 = vmatprep.subr.bf16.mxu0 0
    %53 = vmatpush1.bf16.msra.mxu0 %v46
    %54 = vmatprep.subr.bf16.mxu0 0
    %55 = vmatpush1.bf16.msra.mxu0 0
    %56 = vmatprep.subr.bf16.mxu0 0
    %57 = vmatpush1.bf16.msra.mxu0 0
    %58 = vmatprep.subr.bf16.mxu0 0
    %59 = vmatpush1.bf16.msra.mxu0 0
    %60 = vmatprep.subr.bf16.mxu0 0
    %61 = vmatpush1.bf16.msra.mxu0 0
    %62 = vmatprep.subr.bf16.mxu0 0
    %63 = vmatpush1.bf16.msra.mxu0 0
    %64 = vmatprep.subr.bf16.mxu0 0
    %65 = vmatpush1.bf16.msra.mxu0 0
    %66 = vmatprep.subr.bf16.mxu0 0
    %67 = vmatpush1.bf16.msra.mxu0 0
    %68 = vmatprep.subr.bf16.mxu0 0
    %69 = vmatpush1.bf16.msra.mxu0 0
    %70 = vmatprep.subr.bf16.mxu0 0
    %71 = vmatpush1.bf16.msra.mxu0 0
    %72 = vmatprep.subr.bf16.mxu0 0
    %73 = vmatpush1.bf16.msra.mxu0 0
    %74 = vmatprep.subr.bf16.mxu0 0
    %75 = vmatpush1.bf16.msra.mxu0 0
    %76 = vmatprep.subr.bf16.mxu0 0
    %77 = vmatpush1.bf16.msra.mxu0 0
    %78 = vmatprep.subr.bf16.mxu0 0
    %79 = vmatpush1.bf16.msra.mxu0 0
    %80 = vmatprep.subr.bf16.mxu0 0
    %81 = vmatpush1.bf16.msra.mxu0 0
    %82 = vmatprep.subr.bf16.mxu0 0
    %83 = vmatpush1.bf16.msra.mxu0 0
    %84 = vmatprep.mubr.bf16.mxu0 0
    %85 = vmatmul.mubr.bf16.gmra.mrb[0].mxu0 %v50
    %v86 = vpop.f32.mrb[0].mxu0
    %v87 = vadd.f32 %v40, %v86
    %v88 = vpop.f32.mrb[0].mxu0
    %v89 = vpop.f32.mrb[0].mxu0
    %v90 = vpop.f32.mrb[0].mxu0
    %91 = vdwg.mxu0
    %v92 = vmax.f32 %v87, 0.0
    %v93 = vpack.c.bf16 %v92, %v92
    %v94 = vld [vmem:[%s3] sm:$0xf]
    %v95 = vld [vmem:[%s4] sm:$0x1]
    %v97 = vlaneseq
    %v98 = vshrl.u32 %v97, 7
    %v99 = vsub.s32 0, %v98
    %v100 = vrot.slane %v95, %v99
    %vm102 = vcmask 64512
    %v104 = vsel %vm102, %v93, 0
    %vm106 = vcmask 1043456
    %v108 = vsel %vm106, %v94, 0
    %110 = vmatprep.subr.bf16.mxu0 0
    %111 = vmatpush1.bf16.msra.mxu0 %v108
    %112 = vmatprep.subr.bf16.mxu0 0
    %113 = vmatpush1.bf16.msra.mxu0 0
    %114 = vmatprep.subr.bf16.mxu0 0
    %115 = vmatpush1.bf16.msra.mxu0 0
    %116 = vmatprep.subr.bf16.mxu0 0
    %117 = vmatpush1.bf16.msra.mxu0 0
    %118 = vmatprep.subr.bf16.mxu0 0
    %119 = vmatpush1.bf16.msra.mxu0 0
    %120 = vmatprep.subr.bf16.mxu0 0
    %121 = vmatpush1.bf16.msra.mxu0 0
    %122 = vmatprep.subr.bf16.mxu0 0
    %123 = vmatpush1.bf16.msra.mxu0 0
    %124 = vmatprep.subr.bf16.mxu0 0
    %125 = vmatpush1.bf16.msra.mxu0 0
    %126 = vmatprep.subr.bf16.mxu0 0
    %127 = vmatpush1.bf16.msra.mxu0 0
    %128 = vmatprep.subr.bf16.mxu0 0
    %129 = vmatpush1.bf16.msra.mxu0 0
    %130 = vmatprep.subr.bf16.mxu0 0
    %131 = vmatpush1.bf16.msra.mxu0 0
    %132 = vmatprep.subr.bf16.mxu0 0
    %133 = vmatpush1.bf16.msra.mxu0 0
    %134 = vmatprep.subr.bf16.mxu0 0
    %135 = vmatpush1.bf16.msra.mxu0 0
    %136 = vmatprep.subr.bf16.mxu0 0
    %137 = vmatpush1.bf16.msra.mxu0 0
    %138 = vmatprep.subr.bf16.mxu0 0
    %139 = vmatpush1.bf16.msra.mxu0 0
    %140 = vmatprep.subr.bf16.mxu0 0
    %141 = vmatpush1.bf16.msra.mxu0 0
    %142 = vmatprep.mubr.bf16.mxu0 0
    %143 = vmatmul.mubr.bf16.gmra.mrb[0].mxu0 %v104
    %v144 = vpop.f32.mrb[0].mxu0
    %v145 = vadd.f32 %v100, %v144
    %v146 = vpop.f32.mrb[0].mxu0
    %v147 = vpop.f32.mrb[0].mxu0
    %v148 = vpop.f32.mrb[0].mxu0
    %149 = vdwg.mxu0
    %v150 = vadd.f32 %v145, %v31
    %v151 = vpack.c.bf16 %v150, %v150
    %vm152 = vcmask 125952
    %153 = vst.msk [vmem:[#allocation2] sm:$0xf] %vm152, %v151
  $region33: #{kgprompt_forward.4} parent=0 // pred_fallthru
    _
  %v154 = vld [vmem:[#allocation2] sm:$0xf]
  %v155 = vld [vmem:[%s5] sm:$0xf]
  %v156 = vld [vmem:[%s5 + $0x4] sm:$0xf]
  %v157 = vld [vmem:[%s6] sm:$0x1]
  %v159 = vlaneseq
  %v160 = vshrl.u32 %v159, 7
  %v161 = vsub.s32 0, %v160
  %v162 = vrot.slane %v157, %v161
  %v166 = vunpack.c.l.b16 %v155
  %v167 = vunpack.c.l.b16 %v156
  %v168 = vpack.c.b16 %v167, %v166
  %vm170 = vcmask 130048
  %v172 = vsel %vm170, %v154, 0
  %174 = vmatprep.subr.bf16.mxu0 0
  %175 = vmatpush1.bf16.msra.mxu0 %v168
  %176 = vmatprep.subr.bf16.mxu0 0
  %177 = vmatpush1.bf16.msra.mxu0 0
  %178 = vmatprep.subr.bf16.mxu0 0
  %179 = vmatpush1.bf16.msra.mxu0 0
  %180 = vmatprep.subr.bf16.mxu0 0
  %181 = vmatpush1.bf16.msra.mxu0 0
  %182 = vmatprep.subr.bf16.mxu0 0
  %183 = vmatpush1.bf16.msra.mxu0 0
  %184 = vmatprep.subr.bf16.mxu0 0
  %185 = vmatpush1.bf16.msra.mxu0 0
  %186 = vmatprep.subr.bf16.mxu0 0
  %187 = vmatpush1.bf16.msra.mxu0 0
  %188 = vmatprep.subr.bf16.mxu0 0
  %189 = vmatpush1.bf16.msra.mxu0 0
  %190 = vmatprep.subr.bf16.mxu0 0
  %191 = vmatpush1.bf16.msra.mxu0 0
  %192 = vmatprep.subr.bf16.mxu0 0
  %193 = vmatpush1.bf16.msra.mxu0 0
  %194 = vmatprep.subr.bf16.mxu0 0
  %195 = vmatpush1.bf16.msra.mxu0 0
  %196 = vmatprep.subr.bf16.mxu0 0
  %197 = vmatpush1.bf16.msra.mxu0 0
  %198 = vmatprep.subr.bf16.mxu0 0
  %199 = vmatpush1.bf16.msra.mxu0 0
  %200 = vmatprep.subr.bf16.mxu0 0
  %201 = vmatpush1.bf16.msra.mxu0 0
  %202 = vmatprep.subr.bf16.mxu0 0
  %203 = vmatpush1.bf16.msra.mxu0 0
  %204 = vmatprep.subr.bf16.mxu0 0
  %205 = vmatpush1.bf16.msra.mxu0 0
  %206 = vmatprep.mubr.bf16.mxu0 0
  %207 = vmatmul.mubr.bf16.gmra.mrb[0].mxu0 %v172
  %v208 = vpop.f32.mrb[0].mxu0
  %v209 = vadd.f32 %v162, %v208
  %v210 = vpop.f32.mrb[0].mxu0
  %v211 = vpop.f32.mrb[0].mxu0
  %v212 = vpop.f32.mrb[0].mxu0
  %213 = vdwg.mxu0
  %vm214 = vcmask 261120
  %215 = vst.msk [vmem:[%s7] sm:$0xff] %vm214, %v209
  // Predicated region
  $region34: #{kgprompt_forward.4} parent=0 // pred_check
    _
  $region35: #{kgprompt_forward.4} parent=0 // pred_check_branch
    %217 = sbr.rel (0) target = $region37
  $region36: #{kgprompt_forward.4} parent=0 // pred_region
    _
  $region37: #{kgprompt_forward.4} parent=0 // pred_fallthru
    _
  // Predicated region
  $region38: #{kgprompt_forward.4} parent=0 // pred_check
    _
  $region39: #{kgprompt_forward.4} parent=0 // pred_check_branch
    %219 = sbr.rel (0) target = $region41
  $region40: #{kgprompt_forward.4} parent=0 // pred_region
    _
  $region41: #{kgprompt_forward.4} parent=0 // pred_fallthru
    _

</llo_original>
